<compile_context>
chip_gen: v5e
topology: v5e:2x2
jax: 0.10.0
libtpu: 0.0.40
codegen_flags: <defaults>
</compile_context>

<pallas_src>
import jax
import jax.numpy as jnp
from jax.experimental import pallas as pl
from jax.experimental.pallas import tpu as pltpu


# ----------------------------- kernel 1: QKV projection ----------------------
def _qkv_proj_kernel(x_ref, wq_ref, wk_ref, wv_ref, q_ref, k_ref, v_ref):
    """One grid step = one (batch, row-tile); writes head-major Q, K, V."""
    x = x_ref[0]                                  # (tq, C)
    num_heads = wq_ref.shape[0]
    for h in range(num_heads):                    # static unroll: clean (C, D) slabs
        q_ref[0, h] = jnp.dot(x, wq_ref[h],       # scale already folded into Wq
                              preferred_element_type=jnp.float32).astype(q_ref.dtype)
        k_ref[0, h] = jnp.dot(x, wk_ref[h],
                              preferred_element_type=jnp.float32).astype(k_ref.dtype)
        v_ref[0, h] = jnp.dot(x, wv_ref[h],
                              preferred_element_type=jnp.float32).astype(v_ref.dtype)


# ------------------- kernel 2: flash attention + output projection -----------
def _flash_attn_proj_kernel(q_ref, k_ref, v_ref, wproj_ref, bproj_ref, o_ref,
                            m_sc, l_sc, acc_sc):
    ki = pl.program_id(2)

    @pl.when(ki == 0)
    def _init():
        m_sc[...] = jnp.full(m_sc.shape, -jnp.inf, dtype=m_sc.dtype)
        l_sc[...] = jnp.zeros(l_sc.shape, dtype=l_sc.dtype)
        acc_sc[...] = jnp.zeros(acc_sc.shape, dtype=acc_sc.dtype)

    q = q_ref[0]                                  # (H, tq, D), pre-scaled
    k = k_ref[0]                                  # (H, tk, D)
    v = v_ref[0]                                  # (H, tk, D)

    s = jnp.einsum('hqd,hkd->hqk', q, k,
                   preferred_element_type=jnp.float32)        # (H, tq, tk)
    m_prev = m_sc[...]
    m_new = jnp.maximum(m_prev, jnp.max(s, axis=-1, keepdims=True))
    alpha = jnp.exp(m_prev - m_new)
    p = jnp.exp(s - m_new)
    l_sc[...] = alpha * l_sc[...] + jnp.sum(p, axis=-1, keepdims=True)
    acc_sc[...] = alpha * acc_sc[...] + jnp.einsum(
        'hqk,hkd->hqd', p.astype(v.dtype), v,
        preferred_element_type=jnp.float32)
    m_sc[...] = m_new

    @pl.when(ki == pl.num_programs(2) - 1)
    def _epilogue():
        l = l_sc[...]
        r = pl.reciprocal(l, approx=True)         # EUP slot (nearly free)
        inv_l = r * (2.0 - l * r)                 # one Newton step -> ~f32 exact
        o = acc_sc[...] * inv_l                   # (H, tq, D), f32
        num_heads = o.shape[0]
        out = jnp.zeros((o.shape[1], wproj_ref.shape[2]), jnp.float32)
        for h in range(num_heads):                # concat-free output projection
            out = out + jnp.dot(o[h].astype(wproj_ref.dtype), wproj_ref[h],
                                preferred_element_type=jnp.float32)
        out = out + bproj_ref[...].astype(jnp.float32)
        o_ref[0] = out.astype(o_ref.dtype)


# ----------------------------------- wrapper ---------------------------------
def _pick_tile(n, preferred=128):
    if n % preferred == 0:
        return preferred
    # TODO(synk): pad N to a multiple of 128 (with kv masking) for large,
    # non-128-divisible sequence lengths; small N just uses the full extent.
    return n


def attention(x, w_qkv, w_proj, b_proj, *, num_heads):
    """x: (B, N, C); w_qkv: (C, 3C) (in,out); w_proj: (C, C) (in,out); b_proj: (C,)."""
    B, N, C = x.shape
    assert C % num_heads == 0
    D = C // num_heads
    scale = D ** -0.5
    dtype = x.dtype

    # One-off weight re-pack (outside the kernels): fused (C, 3C) -> three
    # head-major (H, C, D) slabs; softmax scale folded into Wq.
    w3 = w_qkv.reshape(C, 3, num_heads, D)
    w_q = (jnp.transpose(w3[:, 0], (1, 0, 2)) * scale).astype(dtype)   # (H, C, D)
    w_k = jnp.transpose(w3[:, 1], (1, 0, 2)).astype(dtype)
    w_v = jnp.transpose(w3[:, 2], (1, 0, 2)).astype(dtype)
    w_o = w_proj.reshape(num_heads, D, C)                              # (H, D, C)

    # Lane-dense output: pad channel dim to a multiple of 128 (zero weights/bias
    # in the pad columns), slice back after the kernel.
    C_pad = ((C + 127) // 128) * 128
    if C_pad != C:
        w_o = jnp.pad(w_o, ((0, 0), (0, 0), (0, C_pad - C)))
        b_o = jnp.pad(b_proj, (0, C_pad - C)).reshape(1, C_pad)
    else:
        b_o = b_proj.reshape(1, C)
    w_o = w_o.astype(dtype)
    b_o = b_o.astype(dtype)

    tq = _pick_tile(N)
    tk = _pick_tile(N)
    n_q = N // tq
    n_k = N // tk

    # ---- kernel 1: head-major QKV projection --------------------------------
    qkv_shape = jax.ShapeDtypeStruct((B, num_heads, N, D), dtype)
    q, k, v = pl.pallas_call(
        _qkv_proj_kernel,
        out_shape=(qkv_shape, qkv_shape, qkv_shape),
        grid_spec=pltpu.PrefetchScalarGridSpec(
            num_scalar_prefetch=0,
            grid=(B, n_q),
            in_specs=[
                pl.BlockSpec((1, tq, C), lambda b, i: (b, i, 0)),
                pl.BlockSpec((num_heads, C, D), lambda b, i: (0, 0, 0)),
                pl.BlockSpec((num_heads, C, D), lambda b, i: (0, 0, 0)),
                pl.BlockSpec((num_heads, C, D), lambda b, i: (0, 0, 0)),
            ],
            out_specs=(
                pl.BlockSpec((1, num_heads, tq, D), lambda b, i: (b, 0, i, 0)),
                pl.BlockSpec((1, num_heads, tq, D), lambda b, i: (b, 0, i, 0)),
                pl.BlockSpec((1, num_heads, tq, D), lambda b, i: (b, 0, i, 0)),
            ),
        ),
        compiler_params=pltpu.CompilerParams(
            dimension_semantics=("parallel", "parallel")),
    )(x, w_q, w_k, w_v)

    # ---- kernel 2: flash attention + fused output projection ----------------
    out = pl.pallas_call(
        _flash_attn_proj_kernel,
        out_shape=jax.ShapeDtypeStruct((B, N, C_pad), dtype),
        grid_spec=pltpu.PrefetchScalarGridSpec(
            num_scalar_prefetch=0,
            grid=(B, n_q, n_k),
            in_specs=[
                pl.BlockSpec((1, num_heads, tq, D), lambda b, qi, ki: (b, 0, qi, 0)),
                pl.BlockSpec((1, num_heads, tk, D), lambda b, qi, ki: (b, 0, ki, 0)),
                pl.BlockSpec((1, num_heads, tk, D), lambda b, qi, ki: (b, 0, ki, 0)),
                pl.BlockSpec((num_heads, D, C_pad), lambda b, qi, ki: (0, 0, 0)),
                pl.BlockSpec((1, C_pad), lambda b, qi, ki: (0, 0)),
            ],
            out_specs=pl.BlockSpec((1, tq, C_pad), lambda b, qi, ki: (b, qi, 0)),
            scratch_shapes=[
                pltpu.VMEM((num_heads, tq, 1), jnp.float32),   # running max
                pltpu.VMEM((num_heads, tq, 1), jnp.float32),   # running sum
                pltpu.VMEM((num_heads, tq, D), jnp.float32),   # accumulator
            ],
        ),
        compiler_params=pltpu.CompilerParams(
            dimension_semantics=("parallel", "parallel", "arbitrary")),
    )(q, k, v, w_o, b_o)

    if C_pad != C:
        out = out[:, :, :C]
    return out


# ----------------------------- pure-JAX reference ----------------------------
def attention_ref(x, w_qkv, w_proj, b_proj, *, num_heads):
    B, N, C = x.shape
    D = C // num_heads
    scale = D ** -0.5
    qkv = x @ w_qkv                                            # (B, N, 3C)
    qkv = qkv.reshape(B, N, 3, num_heads, D).transpose(2, 0, 3, 1, 4)
    q, k, v = qkv[0], qkv[1], qkv[2]                           # (B, H, N, D)
    attn = jnp.einsum('bhnd,bhmd->bhnm', q, k) * scale
    attn = jax.nn.softmax(attn, axis=-1)
    out = jnp.einsum('bhnm,bhmd->bhnd', attn, v)
    out = out.transpose(0, 2, 1, 3).reshape(B, N, C)
    return out @ w_proj + b_proj


if __name__ == "__main__":
    # Small shapes consistent with the module: dim=32, num_heads=8 -> head_dim=4.
    B, N, C, H = 2, 8, 32, 8

    key = jax.random.PRNGKey(0)
    kx, kqkv, kproj, kb = jax.random.split(key, 4)

    x = jax.random.normal(kx, (B, N, C), dtype=jnp.float32)
    # Deterministic synthetic parameters (in -> out layout, i.e. torch W.T).
    w_qkv = 0.02 * jax.random.normal(kqkv, (C, 3 * C), dtype=jnp.float32)
    w_proj = 0.02 * jax.random.normal(kproj, (C, C), dtype=jnp.float32)
    b_proj = 0.02 * jax.random.normal(kb, (C,), dtype=jnp.float32)

    out = attention(x, w_qkv, w_proj, b_proj, num_heads=H)
    out = jax.block_until_ready(out)

    ref = attention_ref(x, w_qkv, w_proj, b_proj, num_heads=H)
    assert out.shape == (B, N, C)
    # Slightly relaxed vs f32-exact: approx-reciprocal (+Newton step) and a
    # different (per-head) summation order than the XLA reference.
    assert jnp.allclose(out, ref, atol=1e-4, rtol=1e-4), "mismatch vs reference"

    print("KERNEL_OK")
</pallas_src>

<mosaic_0001>
module attributes {stable_mosaic.version = 11 : i64} {
  func.func @_qkv_proj_kernel(%arg0: i32, %arg1: i32, %arg2: memref<1x8x32xf32, #tpu.memory_space<vmem>>, %arg3: memref<8x32x4xf32, #tpu.memory_space<vmem>>, %arg4: memref<8x32x4xf32, #tpu.memory_space<vmem>>, %arg5: memref<8x32x4xf32, #tpu.memory_space<vmem>>, %arg6: memref<1x8x8x4xf32, #tpu.memory_space<vmem>>, %arg7: memref<1x8x8x4xf32, #tpu.memory_space<vmem>>, %arg8: memref<1x8x8x4xf32, #tpu.memory_space<vmem>>) attributes {dimension_semantics = [#tpu.dimension_semantics<parallel>, #tpu.dimension_semantics<parallel>], iteration_bounds = array<i64: 2, 1>, scalar_prefetch = 0 : i64, scratch_operands = 0 : i64, tpu.core_type = #tpu.core_type<tc>, window_params = [{transform_indices = @transform_0, window_bounds = array<i64: 1, 8, 32>}, {pipeline_mode = #tpu.pipeline_mode<synchronous>, transform_indices = @transform_1, window_bounds = array<i64: 8, 32, 4>}, {pipeline_mode = #tpu.pipeline_mode<synchronous>, transform_indices = @transform_2, window_bounds = array<i64: 8, 32, 4>}, {pipeline_mode = #tpu.pipeline_mode<synchronous>, transform_indices = @transform_3, window_bounds = array<i64: 8, 32, 4>}, {transform_indices = @transform_4, window_bounds = array<i64: 1, 8, 8, 4>}, {transform_indices = @transform_5, window_bounds = array<i64: 1, 8, 8, 4>}, {transform_indices = @transform_6, window_bounds = array<i64: 1, 8, 8, 4>}]} {
    %c0 = arith.constant 0 : index
    %c0_0 = arith.constant 0 : index
    %c0_1 = arith.constant 0 : index
    %0 = vector.load %arg2[%c0, %c0_0, %c0_1] : memref<1x8x32xf32, #tpu.memory_space<vmem>>, vector<1x8x32xf32>
    %1 = vector.shape_cast %0 : vector<1x8x32xf32> to vector<8x32xf32>
    %c0_2 = arith.constant 0 : index
    %c0_3 = arith.constant 0 : index
    %c0_4 = arith.constant 0 : index
    %2 = vector.load %arg3[%c0_2, %c0_3, %c0_4] : memref<8x32x4xf32, #tpu.memory_space<vmem>>, vector<1x32x4xf32>
    %3 = vector.shape_cast %2 : vector<1x32x4xf32> to vector<32x4xf32>
    %cst = arith.constant dense<0.000000e+00> : vector<8x4xf32>
    %4 = tpu.matmul %1, %3, %cst {dimension_numbers = #tpu.dot_dimension_numbers<[1], [0], [0], [1], [0, 0, 1, 1], [], []>} : vector<8x32xf32>, vector<32x4xf32>, vector<8x4xf32> -> vector<8x4xf32>
    %c0_5 = arith.constant 0 : index
    %c0_6 = arith.constant 0 : index
    %c0_7 = arith.constant 0 : index
    %c0_8 = arith.constant 0 : index
    %5 = vector.load %arg6[%c0_5, %c0_6, %c0_7, %c0_8] : memref<1x8x8x4xf32, #tpu.memory_space<vmem>>, vector<1x1x8x4xf32>
    %6 = vector.shape_cast %5 : vector<1x1x8x4xf32> to vector<8x4xf32>
    %7 = vector.shape_cast %4 : vector<8x4xf32> to vector<1x1x8x4xf32>
    tpu.vector_store %arg6[%c0_5, %c0_6, %c0_7, %c0_8], %7 {strides = array<i32>} : memref<1x8x8x4xf32, #tpu.memory_space<vmem>>, vector<1x1x8x4xf32>,
    %c0_9 = arith.constant 0 : index
    %c0_10 = arith.constant 0 : index
    %c0_11 = arith.constant 0 : index
    %8 = vector.load %arg4[%c0_9, %c0_10, %c0_11] : memref<8x32x4xf32, #tpu.memory_space<vmem>>, vector<1x32x4xf32>
    %9 = vector.shape_cast %8 : vector<1x32x4xf32> to vector<32x4xf32>
    %cst_12 = arith.constant dense<0.000000e+00> : vector<8x4xf32>
    %10 = tpu.matmul %1, %9, %cst_12 {dimension_numbers = #tpu.dot_dimension_numbers<[1], [0], [0], [1], [0, 0, 1, 1], [], []>} : vector<8x32xf32>, vector<32x4xf32>, vector<8x4xf32> -> vector<8x4xf32>
    %c0_13 = arith.constant 0 : index
    %c0_14 = arith.constant 0 : index
    %c0_15 = arith.constant 0 : index
    %c0_16 = arith.constant 0 : index
    %11 = vector.load %arg7[%c0_13, %c0_14, %c0_15, %c0_16] : memref<1x8x8x4xf32, #tpu.memory_space<vmem>>, vector<1x1x8x4xf32>
    %12 = vector.shape_cast %11 : vector<1x1x8x4xf32> to vector<8x4xf32>
    %13 = vector.shape_cast %10 : vector<8x4xf32> to vector<1x1x8x4xf32>
    tpu.vector_store %arg7[%c0_13, %c0_14, %c0_15, %c0_16], %13 {strides = array<i32>} : memref<1x8x8x4xf32, #tpu.memory_space<vmem>>, vector<1x1x8x4xf32>,
    %c0_17 = arith.constant 0 : index
    %c0_18 = arith.constant 0 : index
    %c0_19 = arith.constant 0 : index
    %14 = vector.load %arg5[%c0_17, %c0_18, %c0_19] : memref<8x32x4xf32, #tpu.memory_space<vmem>>, vector<1x32x4xf32>
    %15 = vector.shape_cast %14 : vector<1x32x4xf32> to vector<32x4xf32>
    %cst_20 = arith.constant dense<0.000000e+00> : vector<8x4xf32>
    %16 = tpu.matmul %1, %15, %cst_20 {dimension_numbers = #tpu.dot_dimension_numbers<[1], [0], [0], [1], [0, 0, 1, 1], [], []>} : vector<8x32xf32>, vector<32x4xf32>, vector<8x4xf32> -> vector<8x4xf32>
    %c0_21 = arith.constant 0 : index
    %c0_22 = arith.constant 0 : index
    %c0_23 = arith.constant 0 : index
    %c0_24 = arith.constant 0 : index
    %17 = vector.load %arg8[%c0_21, %c0_22, %c0_23, %c0_24] : memref<1x8x8x4xf32, #tpu.memory_space<vmem>>, vector<1x1x8x4xf32>
    %18 = vector.shape_cast %17 : vector<1x1x8x4xf32> to vector<8x4xf32>
    %19 = vector.shape_cast %16 : vector<8x4xf32> to vector<1x1x8x4xf32>
    tpu.vector_store %arg8[%c0_21, %c0_22, %c0_23, %c0_24], %19 {strides = array<i32>} : memref<1x8x8x4xf32, #tpu.memory_space<vmem>>, vector<1x1x8x4xf32>,
    %c1 = arith.constant 1 : index
    %c0_25 = arith.constant 0 : index
    %c0_26 = arith.constant 0 : index
    %20 = vector.load %arg3[%c1, %c0_25, %c0_26] : memref<8x32x4xf32, #tpu.memory_space<vmem>>, vector<1x32x4xf32>
    %21 = vector.shape_cast %20 : vector<1x32x4xf32> to vector<32x4xf32>
    %cst_27 = arith.constant dense<0.000000e+00> : vector<8x4xf32>
    %22 = tpu.matmul %1, %21, %cst_27 {dimension_numbers = #tpu.dot_dimension_numbers<[1], [0], [0], [1], [0, 0, 1, 1], [], []>} : vector<8x32xf32>, vector<32x4xf32>, vector<8x4xf32> -> vector<8x4xf32>
    %c0_28 = arith.constant 0 : index
    %c1_29 = arith.constant 1 : index
    %c0_30 = arith.constant 0 : index
    %c0_31 = arith.constant 0 : index
    %23 = vector.load %arg6[%c0_28, %c1_29, %c0_30, %c0_31] : memref<1x8x8x4xf32, #tpu.memory_space<vmem>>, vector<1x1x8x4xf32>
    %24 = vector.shape_cast %23 : vector<1x1x8x4xf32> to vector<8x4xf32>
    %25 = vector.shape_cast %22 : vector<8x4xf32> to vector<1x1x8x4xf32>
    tpu.vector_store %arg6[%c0_28, %c1_29, %c0_30, %c0_31], %25 {strides = array<i32>} : memref<1x8x8x4xf32, #tpu.memory_space<vmem>>, vector<1x1x8x4xf32>,
    %c1_32 = arith.constant 1 : index
    %c0_33 = arith.constant 0 : index
    %c0_34 = arith.constant 0 : index
    %26 = vector.load %arg4[%c1_32, %c0_33, %c0_34] : memref<8x32x4xf32, #tpu.memory_space<vmem>>, vector<1x32x4xf32>
    %27 = vector.shape_cast %26 : vector<1x32x4xf32> to vector<32x4xf32>
    %cst_35 = arith.constant dense<0.000000e+00> : vector<8x4xf32>
    %28 = tpu.matmul %1, %27, %cst_35 {dimension_numbers = #tpu.dot_dimension_numbers<[1], [0], [0], [1], [0, 0, 1, 1], [], []>} : vector<8x32xf32>, vector<32x4xf32>, vector<8x4xf32> -> vector<8x4xf32>
    %c0_36 = arith.constant 0 : index
    %c1_37 = arith.constant 1 : index
    %c0_38 = arith.constant 0 : index
    %c0_39 = arith.constant 0 : index
    %29 = vector.load %arg7[%c0_36, %c1_37, %c0_38, %c0_39] : memref<1x8x8x4xf32, #tpu.memory_space<vmem>>, vector<1x1x8x4xf32>
    %30 = vector.shape_cast %29 : vector<1x1x8x4xf32> to vector<8x4xf32>
    %31 = vector.shape_cast %28 : vector<8x4xf32> to vector<1x1x8x4xf32>
    tpu.vector_store %arg7[%c0_36, %c1_37, %c0_38, %c0_39], %31 {strides = array<i32>} : memref<1x8x8x4xf32, #tpu.memory_space<vmem>>, vector<1x1x8x4xf32>,
    %c1_40 = arith.constant 1 : index
    %c0_41 = arith.constant 0 : index
    %c0_42 = arith.constant 0 : index
    %32 = vector.load %arg5[%c1_40, %c0_41, %c0_42] : memref<8x32x4xf32, #tpu.memory_space<vmem>>, vector<1x32x4xf32>
    %33 = vector.shape_cast %32 : vector<1x32x4xf32> to vector<32x4xf32>
    %cst_43 = arith.constant dense<0.000000e+00> : vector<8x4xf32>
    %34 = tpu.matmul %1, %33, %cst_43 {dimension_numbers = #tpu.dot_dimension_numbers<[1], [0], [0], [1], [0, 0, 1, 1], [], []>} : vector<8x32xf32>, vector<32x4xf32>, vector<8x4xf32> -> vector<8x4xf32>
    %c0_44 = arith.constant 0 : index
    %c1_45 = arith.constant 1 : index
    %c0_46 = arith.constant 0 : index
    %c0_47 = arith.constant 0 : index
    %35 = vector.load %arg8[%c0_44, %c1_45, %c0_46, %c0_47] : memref<1x8x8x4xf32, #tpu.memory_space<vmem>>, vector<1x1x8x4xf32>
    %36 = vector.shape_cast %35 : vector<1x1x8x4xf32> to vector<8x4xf32>
    %37 = vector.shape_cast %34 : vector<8x4xf32> to vector<1x1x8x4xf32>
    tpu.vector_store %arg8[%c0_44, %c1_45, %c0_46, %c0_47], %37 {strides = array<i32>} : memref<1x8x8x4xf32, #tpu.memory_space<vmem>>, vector<1x1x8x4xf32>,
    %c2 = arith.constant 2 : index
    %c0_48 = arith.constant 0 : index
    %c0_49 = arith.constant 0 : index
    %38 = vector.load %arg3[%c2, %c0_48, %c0_49] : memref<8x32x4xf32, #tpu.memory_space<vmem>>, vector<1x32x4xf32>
    %39 = vector.shape_cast %38 : vector<1x32x4xf32> to vector<32x4xf32>
    %cst_50 = arith.constant dense<0.000000e+00> : vector<8x4xf32>
    %40 = tpu.matmul %1, %39, %cst_50 {dimension_numbers = #tpu.dot_dimension_numbers<[1], [0], [0], [1], [0, 0, 1, 1], [], []>} : vector<8x32xf32>, vector<32x4xf32>, vector<8x4xf32> -> vector<8x4xf32>
    %c0_51 = arith.constant 0 : index
    %c2_52 = arith.constant 2 : index
    %c0_53 = arith.constant 0 : index
    %c0_54 = arith.constant 0 : index
    %41 = vector.load %arg6[%c0_51, %c2_52, %c0_53, %c0_54] : memref<1x8x8x4xf32, #tpu.memory_space<vmem>>, vector<1x1x8x4xf32>
    %42 = vector.shape_cast %41 : vector<1x1x8x4xf32> to vector<8x4xf32>
    %43 = vector.shape_cast %40 : vector<8x4xf32> to vector<1x1x8x4xf32>
    tpu.vector_store %arg6[%c0_51, %c2_52, %c0_53, %c0_54], %43 {strides = array<i32>} : memref<1x8x8x4xf32, #tpu.memory_space<vmem>>, vector<1x1x8x4xf32>,
    %c2_55 = arith.constant 2 : index
    %c0_56 = arith.constant 0 : index
    %c0_57 = arith.constant 0 : index
    %44 = vector.load %arg4[%c2_55, %c0_56, %c0_57] : memref<8x32x4xf32, #tpu.memory_space<vmem>>, vector<1x32x4xf32>
    %45 = vector.shape_cast %44 : vector<1x32x4xf32> to vector<32x4xf32>
    %cst_58 = arith.constant dense<0.000000e+00> : vector<8x4xf32>
    %46 = tpu.matmul %1, %45, %cst_58 {dimension_numbers = #tpu.dot_dimension_numbers<[1], [0], [0], [1], [0, 0, 1, 1], [], []>} : vector<8x32xf32>, vector<32x4xf32>, vector<8x4xf32> -> vector<8x4xf32>
    %c0_59 = arith.constant 0 : index
    %c2_60 = arith.constant 2 : index
    %c0_61 = arith.constant 0 : index
    %c0_62 = arith.constant 0 : index
    %47 = vector.load %arg7[%c0_59, %c2_60, %c0_61, %c0_62] : memref<1x8x8x4xf32, #tpu.memory_space<vmem>>, vector<1x1x8x4xf32>
    %48 = vector.shape_cast %47 : vector<1x1x8x4xf32> to vector<8x4xf32>
    %49 = vector.shape_cast %46 : vector<8x4xf32> to vector<1x1x8x4xf32>
    tpu.vector_store %arg7[%c0_59, %c2_60, %c0_61, %c0_62], %49 {strides = array<i32>} : memref<1x8x8x4xf32, #tpu.memory_space<vmem>>, vector<1x1x8x4xf32>,
    %c2_63 = arith.constant 2 : index
    %c0_64 = arith.constant 0 : index
    %c0_65 = arith.constant 0 : index
    %50 = vector.load %arg5[%c2_63, %c0_64, %c0_65] : memref<8x32x4xf32, #tpu.memory_space<vmem>>, vector<1x32x4xf32>
    %51 = vector.shape_cast %50 : vector<1x32x4xf32> to vector<32x4xf32>
    %cst_66 = arith.constant dense<0.000000e+00> : vector<8x4xf32>
    %52 = tpu.matmul %1, %51, %cst_66 {dimension_numbers = #tpu.dot_dimension_numbers<[1], [0], [0], [1], [0, 0, 1, 1], [], []>} : vector<8x32xf32>, vector<32x4xf32>, vector<8x4xf32> -> vector<8x4xf32>
    %c0_67 = arith.constant 0 : index
    %c2_68 = arith.constant 2 : index
    %c0_69 = arith.constant 0 : index
    %c0_70 = arith.constant 0 : index
    %53 = vector.load %arg8[%c0_67, %c2_68, %c0_69, %c0_70] : memref<1x8x8x4xf32, #tpu.memory_space<vmem>>, vector<1x1x8x4xf32>
    %54 = vector.shape_cast %53 : vector<1x1x8x4xf32> to vector<8x4xf32>
    %55 = vector.shape_cast %52 : vector<8x4xf32> to vector<1x1x8x4xf32>
    tpu.vector_store %arg8[%c0_67, %c2_68, %c0_69, %c0_70], %55 {strides = array<i32>} : memref<1x8x8x4xf32, #tpu.memory_space<vmem>>, vector<1x1x8x4xf32>,
    %c3 = arith.constant 3 : index
    %c0_71 = arith.constant 0 : index
    %c0_72 = arith.constant 0 : index
    %56 = vector.load %arg3[%c3, %c0_71, %c0_72] : memref<8x32x4xf32, #tpu.memory_space<vmem>>, vector<1x32x4xf32>
    %57 = vector.shape_cast %56 : vector<1x32x4xf32> to vector<32x4xf32>
    %cst_73 = arith.constant dense<0.000000e+00> : vector<8x4xf32>
    %58 = tpu.matmul %1, %57, %cst_73 {dimension_numbers = #tpu.dot_dimension_numbers<[1], [0], [0], [1], [0, 0, 1, 1], [], []>} : vector<8x32xf32>, vector<32x4xf32>, vector<8x4xf32> -> vector<8x4xf32>
    %c0_74 = arith.constant 0 : index
    %c3_75 = arith.constant 3 : index
    %c0_76 = arith.constant 0 : index
    %c0_77 = arith.constant 0 : index
    %59 = vector.load %arg6[%c0_74, %c3_75, %c0_76, %c0_77] : memref<1x8x8x4xf32, #tpu.memory_space<vmem>>, vector<1x1x8x4xf32>
    %60 = vector.shape_cast %59 : vector<1x1x8x4xf32> to vector<8x4xf32>
    %61 = vector.shape_cast %58 : vector<8x4xf32> to vector<1x1x8x4xf32>
    tpu.vector_store %arg6[%c0_74, %c3_75, %c0_76, %c0_77], %61 {strides = array<i32>} : memref<1x8x8x4xf32, #tpu.memory_space<vmem>>, vector<1x1x8x4xf32>,
    %c3_78 = arith.constant 3 : index
    %c0_79 = arith.constant 0 : index
    %c0_80 = arith.constant 0 : index
    %62 = vector.load %arg4[%c3_78, %c0_79, %c0_80] : memref<8x32x4xf32, #tpu.memory_space<vmem>>, vector<1x32x4xf32>
    %63 = vector.shape_cast %62 : vector<1x32x4xf32> to vector<32x4xf32>
    %cst_81 = arith.constant dense<0.000000e+00> : vector<8x4xf32>
    %64 = tpu.matmul %1, %63, %cst_81 {dimension_numbers = #tpu.dot_dimension_numbers<[1], [0], [0], [1], [0, 0, 1, 1], [], []>} : vector<8x32xf32>, vector<32x4xf32>, vector<8x4xf32> -> vector<8x4xf32>
    %c0_82 = arith.constant 0 : index
    %c3_83 = arith.constant 3 : index
    %c0_84 = arith.constant 0 : index
    %c0_85 = arith.constant 0 : index
    %65 = vector.load %arg7[%c0_82, %c3_83, %c0_84, %c0_85] : memref<1x8x8x4xf32, #tpu.memory_space<vmem>>, vector<1x1x8x4xf32>
    %66 = vector.shape_cast %65 : vector<1x1x8x4xf32> to vector<8x4xf32>
    %67 = vector.shape_cast %64 : vector<8x4xf32> to vector<1x1x8x4xf32>
    tpu.vector_store %arg7[%c0_82, %c3_83, %c0_84, %c0_85], %67 {strides = array<i32>} : memref<1x8x8x4xf32, #tpu.memory_space<vmem>>, vector<1x1x8x4xf32>,
    %c3_86 = arith.constant 3 : index
    %c0_87 = arith.constant 0 : index
    %c0_88 = arith.constant 0 : index
    %68 = vector.load %arg5[%c3_86, %c0_87, %c0_88] : memref<8x32x4xf32, #tpu.memory_space<vmem>>, vector<1x32x4xf32>
    %69 = vector.shape_cast %68 : vector<1x32x4xf32> to vector<32x4xf32>
    %cst_89 = arith.constant dense<0.000000e+00> : vector<8x4xf32>
    %70 = tpu.matmul %1, %69, %cst_89 {dimension_numbers = #tpu.dot_dimension_numbers<[1], [0], [0], [1], [0, 0, 1, 1], [], []>} : vector<8x32xf32>, vector<32x4xf32>, vector<8x4xf32> -> vector<8x4xf32>
    %c0_90 = arith.constant 0 : index
    %c3_91 = arith.constant 3 : index
    %c0_92 = arith.constant 0 : index
    %c0_93 = arith.constant 0 : index
    %71 = vector.load %arg8[%c0_90, %c3_91, %c0_92, %c0_93] : memref<1x8x8x4xf32, #tpu.memory_space<vmem>>, vector<1x1x8x4xf32>
    %72 = vector.shape_cast %71 : vector<1x1x8x4xf32> to vector<8x4xf32>
    %73 = vector.shape_cast %70 : vector<8x4xf32> to vector<1x1x8x4xf32>
    tpu.vector_store %arg8[%c0_90, %c3_91, %c0_92, %c0_93], %73 {strides = array<i32>} : memref<1x8x8x4xf32, #tpu.memory_space<vmem>>, vector<1x1x8x4xf32>,
    %c4 = arith.constant 4 : index
    %c0_94 = arith.constant 0 : index
    %c0_95 = arith.constant 0 : index
    %74 = vector.load %arg3[%c4, %c0_94, %c0_95] : memref<8x32x4xf32, #tpu.memory_space<vmem>>, vector<1x32x4xf32>
    %75 = vector.shape_cast %74 : vector<1x32x4xf32> to vector<32x4xf32>
    %cst_96 = arith.constant dense<0.000000e+00> : vector<8x4xf32>
    %76 = tpu.matmul %1, %75, %cst_96 {dimension_numbers = #tpu.dot_dimension_numbers<[1], [0], [0], [1], [0, 0, 1, 1], [], []>} : vector<8x32xf32>, vector<32x4xf32>, vector<8x4xf32> -> vector<8x4xf32>
    %c0_97 = arith.constant 0 : index
    %c4_98 = arith.constant 4 : index
    %c0_99 = arith.constant 0 : index
    %c0_100 = arith.constant 0 : index
    %77 = vector.load %arg6[%c0_97, %c4_98, %c0_99, %c0_100] : memref<1x8x8x4xf32, #tpu.memory_space<vmem>>, vector<1x1x8x4xf32>
    %78 = vector.shape_cast %77 : vector<1x1x8x4xf32> to vector<8x4xf32>
    %79 = vector.shape_cast %76 : vector<8x4xf32> to vector<1x1x8x4xf32>
    tpu.vector_store %arg6[%c0_97, %c4_98, %c0_99, %c0_100], %79 {strides = array<i32>} : memref<1x8x8x4xf32, #tpu.memory_space<vmem>>, vector<1x1x8x4xf32>,
    %c4_101 = arith.constant 4 : index
    %c0_102 = arith.constant 0 : index
    %c0_103 = arith.constant 0 : index
    %80 = vector.load %arg4[%c4_101, %c0_102, %c0_103] : memref<8x32x4xf32, #tpu.memory_space<vmem>>, vector<1x32x4xf32>
    %81 = vector.shape_cast %80 : vector<1x32x4xf32> to vector<32x4xf32>
    %cst_104 = arith.constant dense<0.000000e+00> : vector<8x4xf32>
    %82 = tpu.matmul %1, %81, %cst_104 {dimension_numbers = #tpu.dot_dimension_numbers<[1], [0], [0], [1], [0, 0, 1, 1], [], []>} : vector<8x32xf32>, vector<32x4xf32>, vector<8x4xf32> -> vector<8x4xf32>
    %c0_105 = arith.constant 0 : index
    %c4_106 = arith.constant 4 : index
    %c0_107 = arith.constant 0 : index
    %c0_108 = arith.constant 0 : index
    %83 = vector.load %arg7[%c0_105, %c4_106, %c0_107, %c0_108] : memref<1x8x8x4xf32, #tpu.memory_space<vmem>>, vector<1x1x8x4xf32>
    %84 = vector.shape_cast %83 : vector<1x1x8x4xf32> to vector<8x4xf32>
    %85 = vector.shape_cast %82 : vector<8x4xf32> to vector<1x1x8x4xf32>
    tpu.vector_store %arg7[%c0_105, %c4_106, %c0_107, %c0_108], %85 {strides = array<i32>} : memref<1x8x8x4xf32, #tpu.memory_space<vmem>>, vector<1x1x8x4xf32>,
    %c4_109 = arith.constant 4 : index
    %c0_110 = arith.constant 0 : index
    %c0_111 = arith.constant 0 : index
    %86 = vector.load %arg5[%c4_109, %c0_110, %c0_111] : memref<8x32x4xf32, #tpu.memory_space<vmem>>, vector<1x32x4xf32>
    %87 = vector.shape_cast %86 : vector<1x32x4xf32> to vector<32x4xf32>
    %cst_112 = arith.constant dense<0.000000e+00> : vector<8x4xf32>
    %88 = tpu.matmul %1, %87, %cst_112 {dimension_numbers = #tpu.dot_dimension_numbers<[1], [0], [0], [1], [0, 0, 1, 1], [], []>} : vector<8x32xf32>, vector<32x4xf32>, vector<8x4xf32> -> vector<8x4xf32>
    %c0_113 = arith.constant 0 : index
    %c4_114 = arith.constant 4 : index
    %c0_115 = arith.constant 0 : index
    %c0_116 = arith.constant 0 : index
    %89 = vector.load %arg8[%c0_113, %c4_114, %c0_115, %c0_116] : memref<1x8x8x4xf32, #tpu.memory_space<vmem>>, vector<1x1x8x4xf32>
    %90 = vector.shape_cast %89 : vector<1x1x8x4xf32> to vector<8x4xf32>
    %91 = vector.shape_cast %88 : vector<8x4xf32> to vector<1x1x8x4xf32>
    tpu.vector_store %arg8[%c0_113, %c4_114, %c0_115, %c0_116], %91 {strides = array<i32>} : memref<1x8x8x4xf32, #tpu.memory_space<vmem>>, vector<1x1x8x4xf32>,
    %c5 = arith.constant 5 : index
    %c0_117 = arith.constant 0 : index
    %c0_118 = arith.constant 0 : index
    %92 = vector.load %arg3[%c5, %c0_117, %c0_118] : memref<8x32x4xf32, #tpu.memory_space<vmem>>, vector<1x32x4xf32>
    %93 = vector.shape_cast %92 : vector<1x32x4xf32> to vector<32x4xf32>
    %cst_119 = arith.constant dense<0.000000e+00> : vector<8x4xf32>
    %94 = tpu.matmul %1, %93, %cst_119 {dimension_numbers = #tpu.dot_dimension_numbers<[1], [0], [0], [1], [0, 0, 1, 1], [], []>} : vector<8x32xf32>, vector<32x4xf32>, vector<8x4xf32> -> vector<8x4xf32>
    %c0_120 = arith.constant 0 : index
    %c5_121 = arith.constant 5 : index
    %c0_122 = arith.constant 0 : index
    %c0_123 = arith.constant 0 : index
    %95 = vector.load %arg6[%c0_120, %c5_121, %c0_122, %c0_123] : memref<1x8x8x4xf32, #tpu.memory_space<vmem>>, vector<1x1x8x4xf32>
    %96 = vector.shape_cast %95 : vector<1x1x8x4xf32> to vector<8x4xf32>
    %97 = vector.shape_cast %94 : vector<8x4xf32> to vector<1x1x8x4xf32>
    tpu.vector_store %arg6[%c0_120, %c5_121, %c0_122, %c0_123], %97 {strides = array<i32>} : memref<1x8x8x4xf32, #tpu.memory_space<vmem>>, vector<1x1x8x4xf32>,
    %c5_124 = arith.constant 5 : index
    %c0_125 = arith.constant 0 : index
    %c0_126 = arith.constant 0 : index
    %98 = vector.load %arg4[%c5_124, %c0_125, %c0_126] : memref<8x32x4xf32, #tpu.memory_space<vmem>>, vector<1x32x4xf32>
    %99 = vector.shape_cast %98 : vector<1x32x4xf32> to vector<32x4xf32>
    %cst_127 = arith.constant dense<0.000000e+00> : vector<8x4xf32>
    %100 = tpu.matmul %1, %99, %cst_127 {dimension_numbers = #tpu.dot_dimension_numbers<[1], [0], [0], [1], [0, 0, 1, 1], [], []>} : vector<8x32xf32>, vector<32x4xf32>, vector<8x4xf32> -> vector<8x4xf32>
    %c0_128 = arith.constant 0 : index
    %c5_129 = arith.constant 5 : index
    %c0_130 = arith.constant 0 : index
    %c0_131 = arith.constant 0 : index
    %101 = vector.load %arg7[%c0_128, %c5_129, %c0_130, %c0_131] : memref<1x8x8x4xf32, #tpu.memory_space<vmem>>, vector<1x1x8x4xf32>
    %102 = vector.shape_cast %101 : vector<1x1x8x4xf32> to vector<8x4xf32>
    %103 = vector.shape_cast %100 : vector<8x4xf32> to vector<1x1x8x4xf32>
    tpu.vector_store %arg7[%c0_128, %c5_129, %c0_130, %c0_131], %103 {strides = array<i32>} : memref<1x8x8x4xf32, #tpu.memory_space<vmem>>, vector<1x1x8x4xf32>,
    %c5_132 = arith.constant 5 : index
    %c0_133 = arith.constant 0 : index
    %c0_134 = arith.constant 0 : index
    %104 = vector.load %arg5[%c5_132, %c0_133, %c0_134] : memref<8x32x4xf32, #tpu.memory_space<vmem>>, vector<1x32x4xf32>
    %105 = vector.shape_cast %104 : vector<1x32x4xf32> to vector<32x4xf32>
    %cst_135 = arith.constant dense<0.000000e+00> : vector<8x4xf32>
    %106 = tpu.matmul %1, %105, %cst_135 {dimension_numbers = #tpu.dot_dimension_numbers<[1], [0], [0], [1], [0, 0, 1, 1], [], []>} : vector<8x32xf32>, vector<32x4xf32>, vector<8x4xf32> -> vector<8x4xf32>
    %c0_136 = arith.constant 0 : index
    %c5_137 = arith.constant 5 : index
    %c0_138 = arith.constant 0 : index
    %c0_139 = arith.constant 0 : index
    %107 = vector.load %arg8[%c0_136, %c5_137, %c0_138, %c0_139] : memref<1x8x8x4xf32, #tpu.memory_space<vmem>>, vector<1x1x8x4xf32>
    %108 = vector.shape_cast %107 : vector<1x1x8x4xf32> to vector<8x4xf32>
    %109 = vector.shape_cast %106 : vector<8x4xf32> to vector<1x1x8x4xf32>
    tpu.vector_store %arg8[%c0_136, %c5_137, %c0_138, %c0_139], %109 {strides = array<i32>} : memref<1x8x8x4xf32, #tpu.memory_space<vmem>>, vector<1x1x8x4xf32>,
    %c6 = arith.constant 6 : index
    %c0_140 = arith.constant 0 : index
    %c0_141 = arith.constant 0 : index
    %110 = vector.load %arg3[%c6, %c0_140, %c0_141] : memref<8x32x4xf32, #tpu.memory_space<vmem>>, vector<1x32x4xf32>
    %111 = vector.shape_cast %110 : vector<1x32x4xf32> to vector<32x4xf32>
    %cst_142 = arith.constant dense<0.000000e+00> : vector<8x4xf32>
    %112 = tpu.matmul %1, %111, %cst_142 {dimension_numbers = #tpu.dot_dimension_numbers<[1], [0], [0], [1], [0, 0, 1, 1], [], []>} : vector<8x32xf32>, vector<32x4xf32>, vector<8x4xf32> -> vector<8x4xf32>
    %c0_143 = arith.constant 0 : index
    %c6_144 = arith.constant 6 : index
    %c0_145 = arith.constant 0 : index
    %c0_146 = arith.constant 0 : index
    %113 = vector.load %arg6[%c0_143, %c6_144, %c0_145, %c0_146] : memref<1x8x8x4xf32, #tpu.memory_space<vmem>>, vector<1x1x8x4xf32>
    %114 = vector.shape_cast %113 : vector<1x1x8x4xf32> to vector<8x4xf32>
    %115 = vector.shape_cast %112 : vector<8x4xf32> to vector<1x1x8x4xf32>
    tpu.vector_store %arg6[%c0_143, %c6_144, %c0_145, %c0_146], %115 {strides = array<i32>} : memref<1x8x8x4xf32, #tpu.memory_space<vmem>>, vector<1x1x8x4xf32>,
    %c6_147 = arith.constant 6 : index
    %c0_148 = arith.constant 0 : index
    %c0_149 = arith.constant 0 : index
    %116 = vector.load %arg4[%c6_147, %c0_148, %c0_149] : memref<8x32x4xf32, #tpu.memory_space<vmem>>, vector<1x32x4xf32>
    %117 = vector.shape_cast %116 : vector<1x32x4xf32> to vector<32x4xf32>
    %cst_150 = arith.constant dense<0.000000e+00> : vector<8x4xf32>
    %118 = tpu.matmul %1, %117, %cst_150 {dimension_numbers = #tpu.dot_dimension_numbers<[1], [0], [0], [1], [0, 0, 1, 1], [], []>} : vector<8x32xf32>, vector<32x4xf32>, vector<8x4xf32> -> vector<8x4xf32>
    %c0_151 = arith.constant 0 : index
    %c6_152 = arith.constant 6 : index
    %c0_153 = arith.constant 0 : index
    %c0_154 = arith.constant 0 : index
    %119 = vector.load %arg7[%c0_151, %c6_152, %c0_153, %c0_154] : memref<1x8x8x4xf32, #tpu.memory_space<vmem>>, vector<1x1x8x4xf32>
    %120 = vector.shape_cast %119 : vector<1x1x8x4xf32> to vector<8x4xf32>
    %121 = vector.shape_cast %118 : vector<8x4xf32> to vector<1x1x8x4xf32>
    tpu.vector_store %arg7[%c0_151, %c6_152, %c0_153, %c0_154], %121 {strides = array<i32>} : memref<1x8x8x4xf32, #tpu.memory_space<vmem>>, vector<1x1x8x4xf32>,
    %c6_155 = arith.constant 6 : index
    %c0_156 = arith.constant 0 : index
    %c0_157 = arith.constant 0 : index
    %122 = vector.load %arg5[%c6_155, %c0_156, %c0_157] : memref<8x32x4xf32, #tpu.memory_space<vmem>>, vector<1x32x4xf32>
    %123 = vector.shape_cast %122 : vector<1x32x4xf32> to vector<32x4xf32>
    %cst_158 = arith.constant dense<0.000000e+00> : vector<8x4xf32>
    %124 = tpu.matmul %1, %123, %cst_158 {dimension_numbers = #tpu.dot_dimension_numbers<[1], [0], [0], [1], [0, 0, 1, 1], [], []>} : vector<8x32xf32>, vector<32x4xf32>, vector<8x4xf32> -> vector<8x4xf32>
    %c0_159 = arith.constant 0 : index
    %c6_160 = arith.constant 6 : index
    %c0_161 = arith.constant 0 : index
    %c0_162 = arith.constant 0 : index
    %125 = vector.load %arg8[%c0_159, %c6_160, %c0_161, %c0_162] : memref<1x8x8x4xf32, #tpu.memory_space<vmem>>, vector<1x1x8x4xf32>
    %126 = vector.shape_cast %125 : vector<1x1x8x4xf32> to vector<8x4xf32>
    %127 = vector.shape_cast %124 : vector<8x4xf32> to vector<1x1x8x4xf32>
    tpu.vector_store %arg8[%c0_159, %c6_160, %c0_161, %c0_162], %127 {strides = array<i32>} : memref<1x8x8x4xf32, #tpu.memory_space<vmem>>, vector<1x1x8x4xf32>,
    %c7 = arith.constant 7 : index
    %c0_163 = arith.constant 0 : index
    %c0_164 = arith.constant 0 : index
    %128 = vector.load %arg3[%c7, %c0_163, %c0_164] : memref<8x32x4xf32, #tpu.memory_space<vmem>>, vector<1x32x4xf32>
    %129 = vector.shape_cast %128 : vector<1x32x4xf32> to vector<32x4xf32>
    %cst_165 = arith.constant dense<0.000000e+00> : vector<8x4xf32>
    %130 = tpu.matmul %1, %129, %cst_165 {dimension_numbers = #tpu.dot_dimension_numbers<[1], [0], [0], [1], [0, 0, 1, 1], [], []>} : vector<8x32xf32>, vector<32x4xf32>, vector<8x4xf32> -> vector<8x4xf32>
    %c0_166 = arith.constant 0 : index
    %c7_167 = arith.constant 7 : index
    %c0_168 = arith.constant 0 : index
    %c0_169 = arith.constant 0 : index
    %131 = vector.load %arg6[%c0_166, %c7_167, %c0_168, %c0_169] : memref<1x8x8x4xf32, #tpu.memory_space<vmem>>, vector<1x1x8x4xf32>
    %132 = vector.shape_cast %131 : vector<1x1x8x4xf32> to vector<8x4xf32>
    %133 = vector.shape_cast %130 : vector<8x4xf32> to vector<1x1x8x4xf32>
    tpu.vector_store %arg6[%c0_166, %c7_167, %c0_168, %c0_169], %133 {strides = array<i32>} : memref<1x8x8x4xf32, #tpu.memory_space<vmem>>, vector<1x1x8x4xf32>,
    %c7_170 = arith.constant 7 : index
    %c0_171 = arith.constant 0 : index
    %c0_172 = arith.constant 0 : index
    %134 = vector.load %arg4[%c7_170, %c0_171, %c0_172] : memref<8x32x4xf32, #tpu.memory_space<vmem>>, vector<1x32x4xf32>
    %135 = vector.shape_cast %134 : vector<1x32x4xf32> to vector<32x4xf32>
    %cst_173 = arith.constant dense<0.000000e+00> : vector<8x4xf32>
    %136 = tpu.matmul %1, %135, %cst_173 {dimension_numbers = #tpu.dot_dimension_numbers<[1], [0], [0], [1], [0, 0, 1, 1], [], []>} : vector<8x32xf32>, vector<32x4xf32>, vector<8x4xf32> -> vector<8x4xf32>
    %c0_174 = arith.constant 0 : index
    %c7_175 = arith.constant 7 : index
    %c0_176 = arith.constant 0 : index
    %c0_177 = arith.constant 0 : index
    %137 = vector.load %arg7[%c0_174, %c7_175, %c0_176, %c0_177] : memref<1x8x8x4xf32, #tpu.memory_space<vmem>>, vector<1x1x8x4xf32>
    %138 = vector.shape_cast %137 : vector<1x1x8x4xf32> to vector<8x4xf32>
    %139 = vector.shape_cast %136 : vector<8x4xf32> to vector<1x1x8x4xf32>
    tpu.vector_store %arg7[%c0_174, %c7_175, %c0_176, %c0_177], %139 {strides = array<i32>} : memref<1x8x8x4xf32, #tpu.memory_space<vmem>>, vector<1x1x8x4xf32>,
    %c7_178 = arith.constant 7 : index
    %c0_179 = arith.constant 0 : index
    %c0_180 = arith.constant 0 : index
    %140 = vector.load %arg5[%c7_178, %c0_179, %c0_180] : memref<8x32x4xf32, #tpu.memory_space<vmem>>, vector<1x32x4xf32>
    %141 = vector.shape_cast %140 : vector<1x32x4xf32> to vector<32x4xf32>
    %cst_181 = arith.constant dense<0.000000e+00> : vector<8x4xf32>
    %142 = tpu.matmul %1, %141, %cst_181 {dimension_numbers = #tpu.dot_dimension_numbers<[1], [0], [0], [1], [0, 0, 1, 1], [], []>} : vector<8x32xf32>, vector<32x4xf32>, vector<8x4xf32> -> vector<8x4xf32>
    %c0_182 = arith.constant 0 : index
    %c7_183 = arith.constant 7 : index
    %c0_184 = arith.constant 0 : index
    %c0_185 = arith.constant 0 : index
    %143 = vector.load %arg8[%c0_182, %c7_183, %c0_184, %c0_185] : memref<1x8x8x4xf32, #tpu.memory_space<vmem>>, vector<1x1x8x4xf32>
    %144 = vector.shape_cast %143 : vector<1x1x8x4xf32> to vector<8x4xf32>
    %145 = vector.shape_cast %142 : vector<8x4xf32> to vector<1x1x8x4xf32>
    tpu.vector_store %arg8[%c0_182, %c7_183, %c0_184, %c0_185], %145 {strides = array<i32>} : memref<1x8x8x4xf32, #tpu.memory_space<vmem>>, vector<1x1x8x4xf32>,
    return
  }
  func.func @transform_0(%arg0: i32, %arg1: i32) -> (i32, i32, i32) {
    %c0_i32 = arith.constant 0 : i32
    %c0_i32_0 = arith.constant 0 : i32
    return %arg0, %arg1, %c0_i32 : i32, i32, i32
  }
  func.func @transform_1(%arg0: i32, %arg1: i32) -> (i32, i32, i32) {
    %c0_i32 = arith.constant 0 : i32
    %c0_i32_0 = arith.constant 0 : i32
    %c0_i32_1 = arith.constant 0 : i32
    %c0_i32_2 = arith.constant 0 : i32
    return %c0_i32, %c0_i32_0, %c0_i32_1 : i32, i32, i32
  }
  func.func @transform_2(%arg0: i32, %arg1: i32) -> (i32, i32, i32) {
    %c0_i32 = arith.constant 0 : i32
    %c0_i32_0 = arith.constant 0 : i32
    %c0_i32_1 = arith.constant 0 : i32
    %c0_i32_2 = arith.constant 0 : i32
    return %c0_i32, %c0_i32_0, %c0_i32_1 : i32, i32, i32
  }
  func.func @transform_3(%arg0: i32, %arg1: i32) -> (i32, i32, i32) {
    %c0_i32 = arith.constant 0 : i32
    %c0_i32_0 = arith.constant 0 : i32
    %c0_i32_1 = arith.constant 0 : i32
    %c0_i32_2 = arith.constant 0 : i32
    return %c0_i32, %c0_i32_0, %c0_i32_1 : i32, i32, i32
  }
  func.func @transform_4(%arg0: i32, %arg1: i32) -> (i32, i32, i32, i32) {
    %c0_i32 = arith.constant 0 : i32
    %c0_i32_0 = arith.constant 0 : i32
    %c0_i32_1 = arith.constant 0 : i32
    return %arg0, %c0_i32, %arg1, %c0_i32_0 : i32, i32, i32, i32
  }
  func.func @transform_5(%arg0: i32, %arg1: i32) -> (i32, i32, i32, i32) {
    %c0_i32 = arith.constant 0 : i32
    %c0_i32_0 = arith.constant 0 : i32
    %c0_i32_1 = arith.constant 0 : i32
    return %arg0, %c0_i32, %arg1, %c0_i32_0 : i32, i32, i32, i32
  }
  func.func @transform_6(%arg0: i32, %arg1: i32) -> (i32, i32, i32, i32) {
    %c0_i32 = arith.constant 0 : i32
    %c0_i32_0 = arith.constant 0 : i32
    %c0_i32_1 = arith.constant 0 : i32
    return %arg0, %c0_i32, %arg1, %c0_i32_0 : i32, i32, i32, i32
  }
}

</mosaic_0001>

<llo_original>
// kernel: tpu_custom_call.1
$region0: #{tpu_custom_call.1}
  #allocation0 [shape = 'u32[]', space=smem, size = 0x4, offset = 0x4, fixed_abs, tag = 'smem constant byte address 0x4 - core index']
  #allocation1 [shape = 'u32[72,128]{1,0:T(1,128)}', space=vmem, size = 0x9000, scoped, tag = 'internal scratch']
  %s0 = inlined_call_operand.vmem [shape: f32[2,8,32], index: 0, kind: input, shape index: {}]
  %s1 = inlined_call_operand.vmem [shape: f32[8,32,4], index: 1, kind: input, shape index: {}]
  %s2 = inlined_call_operand.vmem [shape: f32[8,32,4], index: 2, kind: input, shape index: {}]
  %s3 = inlined_call_operand.vmem [shape: f32[8,32,4], index: 3, kind: input, shape index: {}]
  %s4 = inlined_call_operand.vmem [shape: f32[2,8,8,4], index: 4, kind: output, shape index: {0}]
  %s5 = inlined_call_operand.vmem [shape: f32[2,8,8,4], index: 5, kind: output, shape index: {1}]
  %s6 = inlined_call_operand.vmem [shape: f32[2,8,8,4], index: 6, kind: output, shape index: {2}]
  %7 = xla_tuple %s4, %s5, %s6
  %s8 = sld [smem:[#allocation0]]
  $region65: #{tpu_custom_call.1} parent=0
    _
  %s10 = ssub.s32 1, %s8
  %s11 = scalar_select 0, %s10, %s8
  loop: start=0, step=1, limit=4
  $region2: #{tpu_custom_call.1} parent=0 // loop_pre_header
    _
  $region3: #{tpu_custom_call.1} parent=0 // loop_header
    %s13 = sphi 0, %s17
    %p14 = scmp.ge.s32.totalorder %s13, 4
    %s20 = sphi 0, %s32
    %s21 = sphi 0, %s28
    %s22 = sphi 0, %s20
    %s23 = sphi 0, %s21
    %s24 = sphi 0, %s22
    %s25 = sphi 0, %s23
    %s37 = sphi 0, %s39
    %s40 = sphi 0, %s37
    %s41 = sphi 0, %s40
    %s57 = sphi 0, %s41
    %s61 = sphi 0, %s61
    %s63 = sphi 0, %s61
    %s64 = sphi 0, %s63
    %s78 = sphi 0, %s64
    %s82 = sphi 0, %s82
    %s84 = sphi 0, %s82
    %s85 = sphi 0, %s84
    %s99 = sphi 0, %s85
    %s103 = sphi 0, %s103
    %s105 = sphi 0, %s103
    %s106 = sphi 0, %s105
    %s120 = sphi 0, %s106
    %s128 = sphi 0, %s130
    %s131 = sphi 0, %s128
    %s132 = sphi 0, %s131
    %s148 = sphi 0, %s132
    %s156 = sphi 0, %s158
    %s159 = sphi 0, %s156
    %s160 = sphi 0, %s159
    %s176 = sphi 0, %s160
    %s184 = sphi 0, %s186
    %s187 = sphi 0, %s184
    %s188 = sphi 0, %s187
    %s204 = sphi 0, %s188
  $region4: #{tpu_custom_call.1} parent=0 // loop_header_branch
    %16 = sbr.rel (%p14) target = $region8
  $region5: #{tpu_custom_call.1} parent=0 // loop_body
    %s18 = ssub.s32 %s13, 1
    %s19 = ssub.s32 %s13, 2
    %s26 = sadd.s32 1, %s21
    %p27 = scmp.ge.s32.totalorder %s26, 1
    %s28 = scalar_select %p27, 0, %s26
    %s29 = sadd.s32 1, %s20
    %s30 = scalar_select %p27, %s29, %s20
    %p31 = scmp.ge.s32.totalorder %s30, 2
    %s32 = scalar_select %p31, 0, %s30
    %s33 = ssub.s32 %s20, %s32
    %s34 = ssub.s32 %s21, %s28
    %s35 = sor.u32 %s33, %s34
    %p36 = scmp.eq.s32.totalorder %s35, 0
    %s38 = sadd.s32 %s37, 1
    %s39 = scalar_select %p36, %s37, %s38
    %p42 = pneg %p36
    %p43 = scmp.eq.s32.totalorder %s13, 1
    %p44 = por %p42, %p43
    %p45 = scmp.ne.s32.totalorder %s37, %s40
    %p46 = scmp.eq.s32.totalorder %s13, 0
    %p47 = por %p45, %p46
    %p48 = scmp.ne.s32.totalorder %s37, %s40
    %p49 = scmp.eq.s32.totalorder %s18, 1
    %p50 = por %p48, %p49
    %p51 = scmp.ne.s32.totalorder %s40, %s41
    %p52 = scmp.eq.s32.totalorder %s18, 0
    %p53 = por %p51, %p52
    %p54 = scmp.ne.s32.totalorder %s40, %s41
    %p55 = scmp.eq.s32.totalorder %s19, 1
    %p56 = por %p54, %p55
    %p58 = scmp.ne.s32.totalorder %s41, %s57
    %p59 = scmp.eq.s32.totalorder %s19, 0
    %p60 = por %p58, %p59
    %s62 = sadd.s32 %s61, 1
    %p65 = scmp.eq.s32.totalorder %s13, 1
    %p66 = scmp.ne.s32.totalorder %s61, %s63
    %p67 = scmp.eq.s32.totalorder %s13, 0
    %p68 = por %p66, %p67
    %p69 = scmp.ne.s32.totalorder %s61, %s63
    %p70 = scmp.eq.s32.totalorder %s18, 1
    %p71 = por %p69, %p70
    %p72 = scmp.ne.s32.totalorder %s63, %s64
    %p73 = scmp.eq.s32.totalorder %s18, 0
    %p74 = por %p72, %p73
    %p75 = scmp.ne.s32.totalorder %s63, %s64
    %p76 = scmp.eq.s32.totalorder %s19, 1
    %p77 = por %p75, %p76
    %p79 = scmp.ne.s32.totalorder %s64, %s78
    %p80 = scmp.eq.s32.totalorder %s19, 0
    %p81 = por %p79, %p80
    %s83 = sadd.s32 %s82, 1
    %p86 = scmp.eq.s32.totalorder %s13, 1
    %p87 = scmp.ne.s32.totalorder %s82, %s84
    %p88 = scmp.eq.s32.totalorder %s13, 0
    %p89 = por %p87, %p88
    %p90 = scmp.ne.s32.totalorder %s82, %s84
    %p91 = scmp.eq.s32.totalorder %s18, 1
    %p92 = por %p90, %p91
    %p93 = scmp.ne.s32.totalorder %s84, %s85
    %p94 = scmp.eq.s32.totalorder %s18, 0
    %p95 = por %p93, %p94
    %p96 = scmp.ne.s32.totalorder %s84, %s85
    %p97 = scmp.eq.s32.totalorder %s19, 1
    %p98 = por %p96, %p97
    %p100 = scmp.ne.s32.totalorder %s85, %s99
    %p101 = scmp.eq.s32.totalorder %s19, 0
    %p102 = por %p100, %p101
    %s104 = sadd.s32 %s103, 1
    %p107 = scmp.eq.s32.totalorder %s13, 1
    %p108 = scmp.ne.s32.totalorder %s103, %s105
    %p109 = scmp.eq.s32.totalorder %s13, 0
    %p110 = por %p108, %p109
    %p111 = scmp.ne.s32.totalorder %s103, %s105
    %p112 = scmp.eq.s32.totalorder %s18, 1
    %p113 = por %p111, %p112
    %p114 = scmp.ne.s32.totalorder %s105, %s106
    %p115 = scmp.eq.s32.totalorder %s18, 0
    %p116 = por %p114, %p115
    %p117 = scmp.ne.s32.totalorder %s105, %s106
    %p118 = scmp.eq.s32.totalorder %s19, 1
    %p119 = por %p117, %p118
    %p121 = scmp.ne.s32.totalorder %s106, %s120
    %p122 = scmp.eq.s32.totalorder %s19, 0
    %p123 = por %p121, %p122
    %s124 = ssub.s32 %s20, %s32
    %s125 = ssub.s32 %s21, %s28
    %s126 = sor.u32 %s124, %s125
    %p127 = scmp.eq.s32.totalorder %s126, 0
    %s129 = sadd.s32 %s128, 1
    %s130 = scalar_select %p127, %s128, %s129
    %p133 = pneg %p127
    %p134 = scmp.eq.s32.totalorder %s13, 1
    %p135 = por %p133, %p134
    %p136 = scmp.ne.s32.totalorder %s128, %s131
    %p137 = scmp.eq.s32.totalorder %s13, 0
    %p138 = por %p136, %p137
    %p139 = scmp.ne.s32.totalorder %s128, %s131
    %p140 = scmp.eq.s32.totalorder %s18, 1
    %p141 = por %p139, %p140
    %p142 = scmp.ne.s32.totalorder %s131, %s132
    %p143 = scmp.eq.s32.totalorder %s18, 0
    %p144 = por %p142, %p143
    %p145 = scmp.ne.s32.totalorder %s131, %s132
    %p146 = scmp.eq.s32.totalorder %s19, 1
    %p147 = por %p145, %p146
    %p149 = scmp.ne.s32.totalorder %s132, %s148
    %p150 = scmp.eq.s32.totalorder %s19, 0
    %p151 = por %p149, %p150
    %s152 = ssub.s32 %s20, %s32
    %s153 = ssub.s32 %s21, %s28
    %s154 = sor.u32 %s152, %s153
    %p155 = scmp.eq.s32.totalorder %s154, 0
    %s157 = sadd.s32 %s156, 1
    %s158 = scalar_select %p155, %s156, %s157
    %p161 = pneg %p155
    %p162 = scmp.eq.s32.totalorder %s13, 1
    %p163 = por %p161, %p162
    %p164 = scmp.ne.s32.totalorder %s156, %s159
    %p165 = scmp.eq.s32.totalorder %s13, 0
    %p166 = por %p164, %p165
    %p167 = scmp.ne.s32.totalorder %s156, %s159
    %p168 = scmp.eq.s32.totalorder %s18, 1
    %p169 = por %p167, %p168
    %p170 = scmp.ne.s32.totalorder %s159, %s160
    %p171 = scmp.eq.s32.totalorder %s18, 0
    %p172 = por %p170, %p171
    %p173 = scmp.ne.s32.totalorder %s159, %s160
    %p174 = scmp.eq.s32.totalorder %s19, 1
    %p175 = por %p173, %p174
    %p177 = scmp.ne.s32.totalorder %s160, %s176
    %p178 = scmp.eq.s32.totalorder %s19, 0
    %p179 = por %p177, %p178
    %s180 = ssub.s32 %s20, %s32
    %s181 = ssub.s32 %s21, %s28
    %s182 = sor.u32 %s180, %s181
    %p183 = scmp.eq.s32.totalorder %s182, 0
    %s185 = sadd.s32 %s184, 1
    %s186 = scalar_select %p183, %s184, %s185
    %p189 = pneg %p183
    %p190 = scmp.eq.s32.totalorder %s13, 1
    %p191 = por %p189, %p190
    %p192 = scmp.ne.s32.totalorder %s184, %s187
    %p193 = scmp.eq.s32.totalorder %s13, 0
    %p194 = por %p192, %p193
    %p195 = scmp.ne.s32.totalorder %s184, %s187
    %p196 = scmp.eq.s32.totalorder %s18, 1
    %p197 = por %p195, %p196
    %p198 = scmp.ne.s32.totalorder %s187, %s188
    %p199 = scmp.eq.s32.totalorder %s18, 0
    %p200 = por %p198, %p199
    %p201 = scmp.ne.s32.totalorder %s187, %s188
    %p202 = scmp.eq.s32.totalorder %s19, 1
    %p203 = por %p201, %p202
    %p205 = scmp.ne.s32.totalorder %s188, %s204
    %p206 = scmp.eq.s32.totalorder %s19, 0
    %p207 = por %p205, %p206
    %p208 = scmp.le.s32.totalorder 1, %s13
    %p209 = scmp.lt.s32.totalorder %s13, 3
    %p210 = pnand %p208, %p209
    %p211 = pneg %p210
    // Predicated region
    $region9: #{tpu_custom_call.1} parent=5 // pred_check
      _
    $region10: #{tpu_custom_call.1} parent=5 // pred_check_branch
      %213 = sbr.rel (%p210) target = $region12
    $region11: #{tpu_custom_call.1} parent=5 // pred_region
      %s214 = ssub.s32 %s13, 1
      // Predicated region
      $region13: #{tpu_custom_call.1} parent=11 // pred_check
        %p215 = pneg %p74
      $region14: #{tpu_custom_call.1} parent=11 // pred_check_branch
        %217 = sbr.rel (%p215) target = $region16
      $region15: #{tpu_custom_call.1} parent=11 // pred_region
        _
      $region16: #{tpu_custom_call.1} parent=11 // pred_fallthru
        _
      // Predicated region
      $region17: #{tpu_custom_call.1} parent=11 // pred_check
        %p218 = pneg %p95
      $region18: #{tpu_custom_call.1} parent=11 // pred_check_branch
        %220 = sbr.rel (%p218) target = $region20
      $region19: #{tpu_custom_call.1} parent=11 // pred_region
        _
      $region20: #{tpu_custom_call.1} parent=11 // pred_fallthru
        _
      // Predicated region
      $region21: #{tpu_custom_call.1} parent=11 // pred_check
        %p221 = pneg %p116
      $region22: #{tpu_custom_call.1} parent=11 // pred_check_branch
        %223 = sbr.rel (%p221) target = $region24
      $region23: #{tpu_custom_call.1} parent=11 // pred_region
        _
      $region24: #{tpu_custom_call.1} parent=11 // pred_fallthru
        _
    $region12: #{tpu_custom_call.1} parent=5 // pred_fallthru
      _
    %p224 = scmp.lt.s32.totalorder %s13, 2
    // Predicated region
    $region25: #{tpu_custom_call.1} parent=5 // pred_check
      %p225 = pneg %p224
    $region26: #{tpu_custom_call.1} parent=5 // pred_check_branch
      %227 = sbr.rel (%p225) target = $region28
    $region27: #{tpu_custom_call.1} parent=5 // pred_region
      // Predicated region
      $region29: #{tpu_custom_call.1} parent=27 // pred_check
        %p228 = pneg %p47
      $region30: #{tpu_custom_call.1} parent=27 // pred_check_branch
        %230 = sbr.rel (%p228) target = $region32
      $region31: #{tpu_custom_call.1} parent=27 // pred_region
        %p231 = scmp.lt.s32.totalorder %s20, 1
        %s232 = scalar_select %p231, %s20, 1
        %p233 = scmp.lt.s32.totalorder %s21, 0
        %s234 = scalar_select %p233, %s21, 0
        %s235 = sadd.s32 %s234, %s232
        %s236 = smul.addr %s235, 8
        %s237 = scalar_lea.vmem %s0, %s236
      $region32: #{tpu_custom_call.1} parent=27 // pred_fallthru
        _
    $region28: #{tpu_custom_call.1} parent=5 // pred_fallthru
      _
    %p238 = scmp.le.s32.totalorder 1, %s13
    %p239 = scmp.lt.s32.totalorder %s13, 3
    %p240 = pnand %p238, %p239
    %p241 = pneg %p240
    // Predicated region
    $region33: #{tpu_custom_call.1} parent=5 // pred_check
      _
    $region34: #{tpu_custom_call.1} parent=5 // pred_check_branch
      %243 = sbr.rel (%p240) target = $region36
    $region35: #{tpu_custom_call.1} parent=5 // pred_region
      %s244 = ssub.s32 %s13, 1
      %p245 = scmp.lt.s32.totalorder %s22, 1
      %s246 = scalar_select %p245, %s22, 1
      %p247 = scmp.lt.s32.totalorder %s23, 0
      %s248 = scalar_select %p247, %s23, 0
      %s249 = sadd.s32 %s248, %s246
      %s250 = smul.addr %s249, 8
      %s251 = scalar_lea.vmem %s0, %s250
      %p252 = pneg %p53
      %p253 = pneg %p50
      %p254 = pneg %p74
      %p255 = pneg %p71
      %p256 = pneg %p95
      %p257 = pneg %p92
      %p258 = pneg %p116
      %p259 = pneg %p113
      %p260 = pneg %p144
      %p261 = pneg %p141
      %p262 = scmp.lt.s32.totalorder %s22, 1
      %s263 = scalar_select %p262, %s22, 1
      %p264 = scmp.lt.s32.totalorder %s23, 0
      %s265 = scalar_select %p264, %s23, 0
      %s266 = smul.addr %s263, 8
      %s267 = sadd.s32 %s265, %s266
      %s268 = smul.addr %s267, 8
      %s269 = scalar_lea.vmem %s4, %s268
      %p270 = pneg %p172
      %p271 = pneg %p169
      %p272 = scmp.lt.s32.totalorder %s22, 1
      %s273 = scalar_select %p272, %s22, 1
      %p274 = scmp.lt.s32.totalorder %s23, 0
      %s275 = scalar_select %p274, %s23, 0
      %s276 = smul.addr %s273, 8
      %s277 = sadd.s32 %s275, %s276
      %s278 = smul.addr %s277, 8
      %s279 = scalar_lea.vmem %s5, %s278
      %p280 = pneg %p200
      %p281 = pneg %p197
      %p282 = scmp.lt.s32.totalorder %s22, 1
      %s283 = scalar_select %p282, %s22, 1
      %p284 = scmp.lt.s32.totalorder %s23, 0
      %s285 = scalar_select %p284, %s23, 0
      %s286 = smul.addr %s283, 8
      %s287 = sadd.s32 %s285, %s286
      %s288 = smul.addr %s287, 8
      %s289 = scalar_lea.vmem %s6, %s288
      %p290 = scmp.lt.s32.totalorder %s22, 1
      %s291 = scalar_select %p290, %s22, 1
      %p292 = scmp.lt.s32.totalorder %s23, 0
      %s293 = scalar_select %p292, %s23, 0
      %s294 = sadd.s32 %s293, %s291
      %s295 = smul.addr %s294, 8
      %s296 = scalar_lea.vmem %s0, %s295
      %p297 = scmp.lt.s32.totalorder %s22, 1
      %s298 = scalar_select %p297, %s22, 1
      %p299 = scmp.lt.s32.totalorder %s23, 0
      %s300 = scalar_select %p299, %s23, 0
      %s301 = smul.addr %s298, 8
      %s302 = sadd.s32 %s300, %s301
      %s303 = smul.addr %s302, 8
      %s304 = scalar_lea.vmem %s4, %s303
      %p305 = scmp.lt.s32.totalorder %s22, 1
      %s306 = scalar_select %p305, %s22, 1
      %p307 = scmp.lt.s32.totalorder %s23, 0
      %s308 = scalar_select %p307, %s23, 0
      %s309 = smul.addr %s306, 8
      %s310 = sadd.s32 %s308, %s309
      %s311 = smul.addr %s310, 8
      %s312 = scalar_lea.vmem %s5, %s311
      %p313 = scmp.lt.s32.totalorder %s22, 1
      %s314 = scalar_select %p313, %s22, 1
      %p315 = scmp.lt.s32.totalorder %s23, 0
      %s316 = scalar_select %p315, %s23, 0
      %s317 = smul.addr %s314, 8
      %s318 = sadd.s32 %s316, %s317
      %s319 = smul.addr %s318, 8
      %s320 = scalar_lea.vmem %s6, %s319
      %v321 = vld [vmem:[%s296] sm:$0xff]
      %v322 = vld [vmem:[%s1] sm:$0xff]
      %v323 = vld [vmem:[%s1 + $0x8] sm:$0xff]
      %v324 = vld [vmem:[%s1 + $0x10] sm:$0xff]
      %v325 = vld [vmem:[%s1 + $0x18] sm:$0xff]
      %vm326 = vcmask 261120
      %v328 = vsel %vm326, %v321, 0
      %330 = vmatpush.msra.mxu0 0.0
      %331 = vmatpush.msra.mxu0 0.0
      %332 = vmatpush.msra.mxu0 0.0
      %333 = vmatpush.msra.mxu0 0.0
      %334 = vmatpush.msra.mxu0 0.0
      %335 = vmatpush.msra.mxu0 0.0
      %336 = vmatpush.msra.mxu0 0.0
      %337 = vmatpush.msra.mxu0 0.0
      %338 = vmatpush.msra.mxu0 0.0
      %339 = vmatpush.msra.mxu0 0.0
      %340 = vmatpush.msra.mxu0 0.0
      %341 = vmatpush.msra.mxu0 0.0
      %342 = vmatpush.msra.mxu0 %v325
      %343 = vmatpush.msra.mxu0 %v324
      %344 = vmatpush.msra.mxu0 %v323
      %345 = vmatpush.msra.mxu0 %v322
      %346 = vmatmul.f32.gmra.mxu0 %v328
      %v347 = vpop.f32.mrf.mxu0
      %v348 = vadd.f32 0.0, %v347
      %349 = vdwg.mxu0
      %vm350 = vcmask 31744
      %351 = vst.msk [vmem:[%s304] sm:$0xff] %vm350, %v348
      %v352 = vld [vmem:[%s2] sm:$0xff]
      %v353 = vld [vmem:[%s2 + $0x8] sm:$0xff]
      %v354 = vld [vmem:[%s2 + $0x10] sm:$0xff]
      %v355 = vld [vmem:[%s2 + $0x18] sm:$0xff]
      %356 = vmatpush.msra.mxu0 0.0
      %357 = vmatpush.msra.mxu0 0.0
      %358 = vmatpush.msra.mxu0 0.0
      %359 = vmatpush.msra.mxu0 0.0
      %360 = vmatpush.msra.mxu0 0.0
      %361 = vmatpush.msra.mxu0 0.0
      %362 = vmatpush.msra.mxu0 0.0
      %363 = vmatpush.msra.mxu0 0.0
      %364 = vmatpush.msra.mxu0 0.0
      %365 = vmatpush.msra.mxu0 0.0
      %366 = vmatpush.msra.mxu0 0.0
      %367 = vmatpush.msra.mxu0 0.0
      %368 = vmatpush.msra.mxu0 %v355
      %369 = vmatpush.msra.mxu0 %v354
      %370 = vmatpush.msra.mxu0 %v353
      %371 = vmatpush.msra.mxu0 %v352
      %372 = vmatmul.f32.gmra.mxu0 %v328
      %v373 = vpop.f32.mrf.mxu0
      %v374 = vadd.f32 0.0, %v373
      %375 = vdwg.mxu0
      %376 = vst.msk [vmem:[%s312] sm:$0xff] %vm350, %v374
      %v377 = vld [vmem:[%s3] sm:$0xff]
      %v378 = vld [vmem:[%s3 + $0x8] sm:$0xff]
      %v379 = vld [vmem:[%s3 + $0x10] sm:$0xff]
      %v380 = vld [vmem:[%s3 + $0x18] sm:$0xff]
      %381 = vmatpush.msra.mxu0 0.0
      %382 = vmatpush.msra.mxu0 0.0
      %383 = vmatpush.msra.mxu0 0.0
      %384 = vmatpush.msra.mxu0 0.0
      %385 = vmatpush.msra.mxu0 0.0
      %386 = vmatpush.msra.mxu0 0.0
      %387 = vmatpush.msra.mxu0 0.0
      %388 = vmatpush.msra.mxu0 0.0
      %389 = vmatpush.msra.mxu0 0.0
      %390 = vmatpush.msra.mxu0 0.0
      %391 = vmatpush.msra.mxu0 0.0
      %392 = vmatpush.msra.mxu0 0.0
      %393 = vmatpush.msra.mxu0 %v380
      %394 = vmatpush.msra.mxu0 %v379
      %395 = vmatpush.msra.mxu0 %v378
      %396 = vmatpush.msra.mxu0 %v377
      %397 = vmatmul.f32.gmra.mxu0 %v328
      %v398 = vpop.f32.mrf.mxu0
      %v399 = vadd.f32 0.0, %v398
      %400 = vdwg.mxu0
      %401 = vst.msk [vmem:[%s320] sm:$0xff] %vm350, %v399
      %s402 = scalar_lea.vmem %s1, 32
      %v403 = vld [vmem:[%s402] sm:$0xff]
      %v404 = vld [vmem:[%s402 + $0x8] sm:$0xff]
      %v405 = vld [vmem:[%s402 + $0x10] sm:$0xff]
      %v406 = vld [vmem:[%s402 + $0x18] sm:$0xff]
      %407 = vmatpush.msra.mxu0 0.0
      %408 = vmatpush.msra.mxu0 0.0
      %409 = vmatpush.msra.mxu0 0.0
      %410 = vmatpush.msra.mxu0 0.0
      %411 = vmatpush.msra.mxu0 0.0
      %412 = vmatpush.msra.mxu0 0.0
      %413 = vmatpush.msra.mxu0 0.0
      %414 = vmatpush.msra.mxu0 0.0
      %415 = vmatpush.msra.mxu0 0.0
      %416 = vmatpush.msra.mxu0 0.0
      %417 = vmatpush.msra.mxu0 0.0
      %418 = vmatpush.msra.mxu0 0.0
      %419 = vmatpush.msra.mxu0 %v406
      %420 = vmatpush.msra.mxu0 %v405
      %421 = vmatpush.msra.mxu0 %v404
      %422 = vmatpush.msra.mxu0 %v403
      %423 = vmatmul.f32.gmra.mxu0 %v328
      %v424 = vpop.f32.mrf.mxu0
      %v425 = vadd.f32 0.0, %v424
      %426 = vdwg.mxu0
      %s427 = scalar_lea.vmem %s304, 8
      %428 = vst.msk [vmem:[%s427] sm:$0xff] %vm350, %v425
      %s429 = scalar_lea.vmem %s2, 32
      %v430 = vld [vmem:[%s429] sm:$0xff]
      %v431 = vld [vmem:[%s429 + $0x8] sm:$0xff]
      %v432 = vld [vmem:[%s429 + $0x10] sm:$0xff]
      %v433 = vld [vmem:[%s429 + $0x18] sm:$0xff]
      %434 = vmatpush.msra.mxu0 0.0
      %435 = vmatpush.msra.mxu0 0.0
      %436 = vmatpush.msra.mxu0 0.0
      %437 = vmatpush.msra.mxu0 0.0
      %438 = vmatpush.msra.mxu0 0.0
      %439 = vmatpush.msra.mxu0 0.0
      %440 = vmatpush.msra.mxu0 0.0
      %441 = vmatpush.msra.mxu0 0.0
      %442 = vmatpush.msra.mxu0 0.0
      %443 = vmatpush.msra.mxu0 0.0
      %444 = vmatpush.msra.mxu0 0.0
      %445 = vmatpush.msra.mxu0 0.0
      %446 = vmatpush.msra.mxu0 %v433
      %447 = vmatpush.msra.mxu0 %v432
      %448 = vmatpush.msra.mxu0 %v431
      %449 = vmatpush.msra.mxu0 %v430
      %450 = vmatmul.f32.gmra.mxu0 %v328
      %v451 = vpop.f32.mrf.mxu0
      %v452 = vadd.f32 0.0, %v451
      %453 = vdwg.mxu0
      %s454 = scalar_lea.vmem %s312, 8
      %455 = vst.msk [vmem:[%s454] sm:$0xff] %vm350, %v452
      %s456 = scalar_lea.vmem %s3, 32
      %v457 = vld [vmem:[%s456] sm:$0xff]
      %v458 = vld [vmem:[%s456 + $0x8] sm:$0xff]
      %v459 = vld [vmem:[%s456 + $0x10] sm:$0xff]
      %v460 = vld [vmem:[%s456 + $0x18] sm:$0xff]
      %461 = vmatpush.msra.mxu0 0.0
      %462 = vmatpush.msra.mxu0 0.0
      %463 = vmatpush.msra.mxu0 0.0
      %464 = vmatpush.msra.mxu0 0.0
      %465 = vmatpush.msra.mxu0 0.0
      %466 = vmatpush.msra.mxu0 0.0
      %467 = vmatpush.msra.mxu0 0.0
      %468 = vmatpush.msra.mxu0 0.0
      %469 = vmatpush.msra.mxu0 0.0
      %470 = vmatpush.msra.mxu0 0.0
      %471 = vmatpush.msra.mxu0 0.0
      %472 = vmatpush.msra.mxu0 0.0
      %473 = vmatpush.msra.mxu0 %v460
      %474 = vmatpush.msra.mxu0 %v459
      %475 = vmatpush.msra.mxu0 %v458
      %476 = vmatpush.msra.mxu0 %v457
      %477 = vmatmul.f32.gmra.mxu0 %v328
      %v478 = vpop.f32.mrf.mxu0
      %v479 = vadd.f32 0.0, %v478
      %480 = vdwg.mxu0
      %s481 = scalar_lea.vmem %s320, 8
      %482 = vst.msk [vmem:[%s481] sm:$0xff] %vm350, %v479
      %s483 = scalar_lea.vmem %s1, 64
      %v484 = vld [vmem:[%s483] sm:$0xff]
      %v485 = vld [vmem:[%s483 + $0x8] sm:$0xff]
      %v486 = vld [vmem:[%s483 + $0x10] sm:$0xff]
      %v487 = vld [vmem:[%s483 + $0x18] sm:$0xff]
      %488 = vmatpush.msra.mxu0 0.0
      %489 = vmatpush.msra.mxu0 0.0
      %490 = vmatpush.msra.mxu0 0.0
      %491 = vmatpush.msra.mxu0 0.0
      %492 = vmatpush.msra.mxu0 0.0
      %493 = vmatpush.msra.mxu0 0.0
      %494 = vmatpush.msra.mxu0 0.0
      %495 = vmatpush.msra.mxu0 0.0
      %496 = vmatpush.msra.mxu0 0.0
      %497 = vmatpush.msra.mxu0 0.0
      %498 = vmatpush.msra.mxu0 0.0
      %499 = vmatpush.msra.mxu0 0.0
      %500 = vmatpush.msra.mxu0 %v487
      %501 = vmatpush.msra.mxu0 %v486
      %502 = vmatpush.msra.mxu0 %v485
      %503 = vmatpush.msra.mxu0 %v484
      %504 = vmatmul.f32.gmra.mxu0 %v328
      %v505 = vpop.f32.mrf.mxu0
      %v506 = vadd.f32 0.0, %v505
      %507 = vdwg.mxu0
      %s508 = scalar_lea.vmem %s304, 16
      %509 = vst.msk [vmem:[%s508] sm:$0xff] %vm350, %v506
      %s510 = scalar_lea.vmem %s2, 64
      %v511 = vld [vmem:[%s510] sm:$0xff]
      %v512 = vld [vmem:[%s510 + $0x8] sm:$0xff]
      %v513 = vld [vmem:[%s510 + $0x10] sm:$0xff]
      %v514 = vld [vmem:[%s510 + $0x18] sm:$0xff]
      %515 = vmatpush.msra.mxu0 0.0
      %516 = vmatpush.msra.mxu0 0.0
      %517 = vmatpush.msra.mxu0 0.0
      %518 = vmatpush.msra.mxu0 0.0
      %519 = vmatpush.msra.mxu0 0.0
      %520 = vmatpush.msra.mxu0 0.0
      %521 = vmatpush.msra.mxu0 0.0
      %522 = vmatpush.msra.mxu0 0.0
      %523 = vmatpush.msra.mxu0 0.0
      %524 = vmatpush.msra.mxu0 0.0
      %525 = vmatpush.msra.mxu0 0.0
      %526 = vmatpush.msra.mxu0 0.0
      %527 = vmatpush.msra.mxu0 %v514
      %528 = vmatpush.msra.mxu0 %v513
      %529 = vmatpush.msra.mxu0 %v512
      %530 = vmatpush.msra.mxu0 %v511
      %531 = vmatmul.f32.gmra.mxu0 %v328
      %v532 = vpop.f32.mrf.mxu0
      %v533 = vadd.f32 0.0, %v532
      %534 = vdwg.mxu0
      %s535 = scalar_lea.vmem %s312, 16
      %536 = vst.msk [vmem:[%s535] sm:$0xff] %vm350, %v533
      %s537 = scalar_lea.vmem %s3, 64
      %v538 = vld [vmem:[%s537] sm:$0xff]
      %v539 = vld [vmem:[%s537 + $0x8] sm:$0xff]
      %v540 = vld [vmem:[%s537 + $0x10] sm:$0xff]
      %v541 = vld [vmem:[%s537 + $0x18] sm:$0xff]
      %542 = vmatpush.msra.mxu0 0.0
      %543 = vmatpush.msra.mxu0 0.0
      %544 = vmatpush.msra.mxu0 0.0
      %545 = vmatpush.msra.mxu0 0.0
      %546 = vmatpush.msra.mxu0 0.0
      %547 = vmatpush.msra.mxu0 0.0
      %548 = vmatpush.msra.mxu0 0.0
      %549 = vmatpush.msra.mxu0 0.0
      %550 = vmatpush.msra.mxu0 0.0
      %551 = vmatpush.msra.mxu0 0.0
      %552 = vmatpush.msra.mxu0 0.0
      %553 = vmatpush.msra.mxu0 0.0
      %554 = vmatpush.msra.mxu0 %v541
      %555 = vmatpush.msra.mxu0 %v540
      %556 = vmatpush.msra.mxu0 %v539
      %557 = vmatpush.msra.mxu0 %v538
      %558 = vmatmul.f32.gmra.mxu0 %v328
      %v559 = vpop.f32.mrf.mxu0
      %v560 = vadd.f32 0.0, %v559
      %561 = vdwg.mxu0
      %s562 = scalar_lea.vmem %s320, 16
      %563 = vst.msk [vmem:[%s562] sm:$0xff] %vm350, %v560
      %s564 = scalar_lea.vmem %s1, 96
      %v565 = vld [vmem:[%s564] sm:$0xff]
      %v566 = vld [vmem:[%s564 + $0x8] sm:$0xff]
      %v567 = vld [vmem:[%s564 + $0x10] sm:$0xff]
      %v568 = vld [vmem:[%s564 + $0x18] sm:$0xff]
      %569 = vmatpush.msra.mxu0 0.0
      %570 = vmatpush.msra.mxu0 0.0
      %571 = vmatpush.msra.mxu0 0.0
      %572 = vmatpush.msra.mxu0 0.0
      %573 = vmatpush.msra.mxu0 0.0
      %574 = vmatpush.msra.mxu0 0.0
      %575 = vmatpush.msra.mxu0 0.0
      %576 = vmatpush.msra.mxu0 0.0
      %577 = vmatpush.msra.mxu0 0.0
      %578 = vmatpush.msra.mxu0 0.0
      %579 = vmatpush.msra.mxu0 0.0
      %580 = vmatpush.msra.mxu0 0.0
      %581 = vmatpush.msra.mxu0 %v568
      %582 = vmatpush.msra.mxu0 %v567
      %583 = vmatpush.msra.mxu0 %v566
      %584 = vmatpush.msra.mxu0 %v565
      %585 = vmatmul.f32.gmra.mxu0 %v328
      %v586 = vpop.f32.mrf.mxu0
      %v587 = vadd.f32 0.0, %v586
      %588 = vdwg.mxu0
      %s589 = scalar_lea.vmem %s304, 24
      %590 = vst.msk [vmem:[%s589] sm:$0xff] %vm350, %v587
      %s591 = scalar_lea.vmem %s2, 96
      %v592 = vld [vmem:[%s591] sm:$0xff]
      %v593 = vld [vmem:[%s591 + $0x8] sm:$0xff]
      %v594 = vld [vmem:[%s591 + $0x10] sm:$0xff]
      %v595 = vld [vmem:[%s591 + $0x18] sm:$0xff]
      %596 = vmatpush.msra.mxu0 0.0
      %597 = vmatpush.msra.mxu0 0.0
      %598 = vmatpush.msra.mxu0 0.0
      %599 = vmatpush.msra.mxu0 0.0
      %600 = vmatpush.msra.mxu0 0.0
      %601 = vmatpush.msra.mxu0 0.0
      %602 = vmatpush.msra.mxu0 0.0
      %603 = vmatpush.msra.mxu0 0.0
      %604 = vmatpush.msra.mxu0 0.0
      %605 = vmatpush.msra.mxu0 0.0
      %606 = vmatpush.msra.mxu0 0.0
      %607 = vmatpush.msra.mxu0 0.0
      %608 = vmatpush.msra.mxu0 %v595
      %609 = vmatpush.msra.mxu0 %v594
      %610 = vmatpush.msra.mxu0 %v593
      %611 = vmatpush.msra.mxu0 %v592
      %612 = vmatmul.f32.gmra.mxu0 %v328
      %v613 = vpop.f32.mrf.mxu0
      %v614 = vadd.f32 0.0, %v613
      %615 = vdwg.mxu0
      %s616 = scalar_lea.vmem %s312, 24
      %617 = vst.msk [vmem:[%s616] sm:$0xff] %vm350, %v614
      %s618 = scalar_lea.vmem %s3, 96
      %v619 = vld [vmem:[%s618] sm:$0xff]
      %v620 = vld [vmem:[%s618 + $0x8] sm:$0xff]
      %v621 = vld [vmem:[%s618 + $0x10] sm:$0xff]
      %v622 = vld [vmem:[%s618 + $0x18] sm:$0xff]
      %623 = vmatpush.msra.mxu0 0.0
      %624 = vmatpush.msra.mxu0 0.0
      %625 = vmatpush.msra.mxu0 0.0
      %626 = vmatpush.msra.mxu0 0.0
      %627 = vmatpush.msra.mxu0 0.0
      %628 = vmatpush.msra.mxu0 0.0
      %629 = vmatpush.msra.mxu0 0.0
      %630 = vmatpush.msra.mxu0 0.0
      %631 = vmatpush.msra.mxu0 0.0
      %632 = vmatpush.msra.mxu0 0.0
      %633 = vmatpush.msra.mxu0 0.0
      %634 = vmatpush.msra.mxu0 0.0
      %635 = vmatpush.msra.mxu0 %v622
      %636 = vmatpush.msra.mxu0 %v621
      %637 = vmatpush.msra.mxu0 %v620
      %638 = vmatpush.msra.mxu0 %v619
      %639 = vmatmul.f32.gmra.mxu0 %v328
      %v640 = vpop.f32.mrf.mxu0
      %v641 = vadd.f32 0.0, %v640
      %642 = vdwg.mxu0
      %s643 = scalar_lea.vmem %s320, 24
      %644 = vst.msk [vmem:[%s643] sm:$0xff] %vm350, %v641
      %s645 = scalar_lea.vmem %s1, 128
      %v646 = vld [vmem:[%s645] sm:$0xff]
      %v647 = vld [vmem:[%s645 + $0x8] sm:$0xff]
      %v648 = vld [vmem:[%s645 + $0x10] sm:$0xff]
      %v649 = vld [vmem:[%s645 + $0x18] sm:$0xff]
      %650 = vmatpush.msra.mxu0 0.0
      %651 = vmatpush.msra.mxu0 0.0
      %652 = vmatpush.msra.mxu0 0.0
      %653 = vmatpush.msra.mxu0 0.0
      %654 = vmatpush.msra.mxu0 0.0
      %655 = vmatpush.msra.mxu0 0.0
      %656 = vmatpush.msra.mxu0 0.0
      %657 = vmatpush.msra.mxu0 0.0
      %658 = vmatpush.msra.mxu0 0.0
      %659 = vmatpush.msra.mxu0 0.0
      %660 = vmatpush.msra.mxu0 0.0
      %661 = vmatpush.msra.mxu0 0.0
      %662 = vmatpush.msra.mxu0 %v649
      %663 = vmatpush.msra.mxu0 %v648
      %664 = vmatpush.msra.mxu0 %v647
      %665 = vmatpush.msra.mxu0 %v646
      %666 = vmatmul.f32.gmra.mxu0 %v328
      %v667 = vpop.f32.mrf.mxu0
      %v668 = vadd.f32 0.0, %v667
      %669 = vdwg.mxu0
      %s670 = scalar_lea.vmem %s304, 32
      %671 = vst.msk [vmem:[%s670] sm:$0xff] %vm350, %v668
      %s672 = scalar_lea.vmem %s2, 128
      %v673 = vld [vmem:[%s672] sm:$0xff]
      %v674 = vld [vmem:[%s672 + $0x8] sm:$0xff]
      %v675 = vld [vmem:[%s672 + $0x10] sm:$0xff]
      %v676 = vld [vmem:[%s672 + $0x18] sm:$0xff]
      %677 = vmatpush.msra.mxu0 0.0
      %678 = vmatpush.msra.mxu0 0.0
      %679 = vmatpush.msra.mxu0 0.0
      %680 = vmatpush.msra.mxu0 0.0
      %681 = vmatpush.msra.mxu0 0.0
      %682 = vmatpush.msra.mxu0 0.0
      %683 = vmatpush.msra.mxu0 0.0
      %684 = vmatpush.msra.mxu0 0.0
      %685 = vmatpush.msra.mxu0 0.0
      %686 = vmatpush.msra.mxu0 0.0
      %687 = vmatpush.msra.mxu0 0.0
      %688 = vmatpush.msra.mxu0 0.0
      %689 = vmatpush.msra.mxu0 %v676
      %690 = vmatpush.msra.mxu0 %v675
      %691 = vmatpush.msra.mxu0 %v674
      %692 = vmatpush.msra.mxu0 %v673
      %693 = vmatmul.f32.gmra.mxu0 %v328
      %v694 = vpop.f32.mrf.mxu0
      %v695 = vadd.f32 0.0, %v694
      %696 = vdwg.mxu0
      %s697 = scalar_lea.vmem %s312, 32
      %698 = vst.msk [vmem:[%s697] sm:$0xff] %vm350, %v695
      %s699 = scalar_lea.vmem %s3, 128
      %v700 = vld [vmem:[%s699] sm:$0xff]
      %v701 = vld [vmem:[%s699 + $0x8] sm:$0xff]
      %v702 = vld [vmem:[%s699 + $0x10] sm:$0xff]
      %v703 = vld [vmem:[%s699 + $0x18] sm:$0xff]
      %704 = vmatpush.msra.mxu0 0.0
      %705 = vmatpush.msra.mxu0 0.0
      %706 = vmatpush.msra.mxu0 0.0
      %707 = vmatpush.msra.mxu0 0.0
      %708 = vmatpush.msra.mxu0 0.0
      %709 = vmatpush.msra.mxu0 0.0
      %710 = vmatpush.msra.mxu0 0.0
      %711 = vmatpush.msra.mxu0 0.0
      %712 = vmatpush.msra.mxu0 0.0
      %713 = vmatpush.msra.mxu0 0.0
      %714 = vmatpush.msra.mxu0 0.0
      %715 = vmatpush.msra.mxu0 0.0
      %716 = vmatpush.msra.mxu0 %v703
      %717 = vmatpush.msra.mxu0 %v702
      %718 = vmatpush.msra.mxu0 %v701
      %719 = vmatpush.msra.mxu0 %v700
      %720 = vmatmul.f32.gmra.mxu0 %v328
      %v721 = vpop.f32.mrf.mxu0
      %v722 = vadd.f32 0.0, %v721
      %723 = vdwg.mxu0
      %s724 = scalar_lea.vmem %s320, 32
      %725 = vst.msk [vmem:[%s724] sm:$0xff] %vm350, %v722
      %s726 = scalar_lea.vmem %s1, 160
      %v727 = vld [vmem:[%s726] sm:$0xff]
      %v728 = vld [vmem:[%s726 + $0x8] sm:$0xff]
      %v729 = vld [vmem:[%s726 + $0x10] sm:$0xff]
      %v730 = vld [vmem:[%s726 + $0x18] sm:$0xff]
      %731 = vmatpush.msra.mxu0 0.0
      %732 = vmatpush.msra.mxu0 0.0
      %733 = vmatpush.msra.mxu0 0.0
      %734 = vmatpush.msra.mxu0 0.0
      %735 = vmatpush.msra.mxu0 0.0
      %736 = vmatpush.msra.mxu0 0.0
      %737 = vmatpush.msra.mxu0 0.0
      %738 = vmatpush.msra.mxu0 0.0
      %739 = vmatpush.msra.mxu0 0.0
      %740 = vmatpush.msra.mxu0 0.0
      %741 = vmatpush.msra.mxu0 0.0
      %742 = vmatpush.msra.mxu0 0.0
      %743 = vmatpush.msra.mxu0 %v730
      %744 = vmatpush.msra.mxu0 %v729
      %745 = vmatpush.msra.mxu0 %v728
      %746 = vmatpush.msra.mxu0 %v727
      %747 = vmatmul.f32.gmra.mxu0 %v328
      %v748 = vpop.f32.mrf.mxu0
      %v749 = vadd.f32 0.0, %v748
      %750 = vdwg.mxu0
      %s751 = scalar_lea.vmem %s304, 40
      %752 = vst.msk [vmem:[%s751] sm:$0xff] %vm350, %v749
      %s753 = scalar_lea.vmem %s2, 160
      %v754 = vld [vmem:[%s753] sm:$0xff]
      %v755 = vld [vmem:[%s753 + $0x8] sm:$0xff]
      %v756 = vld [vmem:[%s753 + $0x10] sm:$0xff]
      %v757 = vld [vmem:[%s753 + $0x18] sm:$0xff]
      %758 = vmatpush.msra.mxu0 0.0
      %759 = vmatpush.msra.mxu0 0.0
      %760 = vmatpush.msra.mxu0 0.0
      %761 = vmatpush.msra.mxu0 0.0
      %762 = vmatpush.msra.mxu0 0.0
      %763 = vmatpush.msra.mxu0 0.0
      %764 = vmatpush.msra.mxu0 0.0
      %765 = vmatpush.msra.mxu0 0.0
      %766 = vmatpush.msra.mxu0 0.0
      %767 = vmatpush.msra.mxu0 0.0
      %768 = vmatpush.msra.mxu0 0.0
      %769 = vmatpush.msra.mxu0 0.0
      %770 = vmatpush.msra.mxu0 %v757
      %771 = vmatpush.msra.mxu0 %v756
      %772 = vmatpush.msra.mxu0 %v755
      %773 = vmatpush.msra.mxu0 %v754
      %774 = vmatmul.f32.gmra.mxu0 %v328
      %v775 = vpop.f32.mrf.mxu0
      %v776 = vadd.f32 0.0, %v775
      %777 = vdwg.mxu0
      %s778 = scalar_lea.vmem %s312, 40
      %779 = vst.msk [vmem:[%s778] sm:$0xff] %vm350, %v776
      %s780 = scalar_lea.vmem %s3, 160
      %v781 = vld [vmem:[%s780] sm:$0xff]
      %v782 = vld [vmem:[%s780 + $0x8] sm:$0xff]
      %v783 = vld [vmem:[%s780 + $0x10] sm:$0xff]
      %v784 = vld [vmem:[%s780 + $0x18] sm:$0xff]
      %785 = vmatpush.msra.mxu0 0.0
      %786 = vmatpush.msra.mxu0 0.0
      %787 = vmatpush.msra.mxu0 0.0
      %788 = vmatpush.msra.mxu0 0.0
      %789 = vmatpush.msra.mxu0 0.0
      %790 = vmatpush.msra.mxu0 0.0
      %791 = vmatpush.msra.mxu0 0.0
      %792 = vmatpush.msra.mxu0 0.0
      %793 = vmatpush.msra.mxu0 0.0
      %794 = vmatpush.msra.mxu0 0.0
      %795 = vmatpush.msra.mxu0 0.0
      %796 = vmatpush.msra.mxu0 0.0
      %797 = vmatpush.msra.mxu0 %v784
      %798 = vmatpush.msra.mxu0 %v783
      %799 = vmatpush.msra.mxu0 %v782
      %800 = vmatpush.msra.mxu0 %v781
      %801 = vmatmul.f32.gmra.mxu0 %v328
      %v802 = vpop.f32.mrf.mxu0
      %v803 = vadd.f32 0.0, %v802
      %804 = vdwg.mxu0
      %s805 = scalar_lea.vmem %s320, 40
      %806 = vst.msk [vmem:[%s805] sm:$0xff] %vm350, %v803
      %s807 = scalar_lea.vmem %s1, 192
      %v808 = vld [vmem:[%s807] sm:$0xff]
      %v809 = vld [vmem:[%s807 + $0x8] sm:$0xff]
      %v810 = vld [vmem:[%s807 + $0x10] sm:$0xff]
      %v811 = vld [vmem:[%s807 + $0x18] sm:$0xff]
      %812 = vmatpush.msra.mxu0 0.0
      %813 = vmatpush.msra.mxu0 0.0
      %814 = vmatpush.msra.mxu0 0.0
      %815 = vmatpush.msra.mxu0 0.0
      %816 = vmatpush.msra.mxu0 0.0
      %817 = vmatpush.msra.mxu0 0.0
      %818 = vmatpush.msra.mxu0 0.0
      %819 = vmatpush.msra.mxu0 0.0
      %820 = vmatpush.msra.mxu0 0.0
      %821 = vmatpush.msra.mxu0 0.0
      %822 = vmatpush.msra.mxu0 0.0
      %823 = vmatpush.msra.mxu0 0.0
      %824 = vmatpush.msra.mxu0 %v811
      %825 = vmatpush.msra.mxu0 %v810
      %826 = vmatpush.msra.mxu0 %v809
      %827 = vmatpush.msra.mxu0 %v808
      %828 = vmatmul.f32.gmra.mxu0 %v328
      %v829 = vpop.f32.mrf.mxu0
      %v830 = vadd.f32 0.0, %v829
      %831 = vdwg.mxu0
      %s832 = scalar_lea.vmem %s304, 48
      %833 = vst.msk [vmem:[%s832] sm:$0xff] %vm350, %v830
      %s834 = scalar_lea.vmem %s2, 192
      %v835 = vld [vmem:[%s834] sm:$0xff]
      %v836 = vld [vmem:[%s834 + $0x8] sm:$0xff]
      %v837 = vld [vmem:[%s834 + $0x10] sm:$0xff]
      %v838 = vld [vmem:[%s834 + $0x18] sm:$0xff]
      %839 = vmatpush.msra.mxu0 0.0
      %840 = vmatpush.msra.mxu0 0.0
      %841 = vmatpush.msra.mxu0 0.0
      %842 = vmatpush.msra.mxu0 0.0
      %843 = vmatpush.msra.mxu0 0.0
      %844 = vmatpush.msra.mxu0 0.0
      %845 = vmatpush.msra.mxu0 0.0
      %846 = vmatpush.msra.mxu0 0.0
      %847 = vmatpush.msra.mxu0 0.0
      %848 = vmatpush.msra.mxu0 0.0
      %849 = vmatpush.msra.mxu0 0.0
      %850 = vmatpush.msra.mxu0 0.0
      %851 = vmatpush.msra.mxu0 %v838
      %852 = vmatpush.msra.mxu0 %v837
      %853 = vmatpush.msra.mxu0 %v836
      %854 = vmatpush.msra.mxu0 %v835
      %855 = vmatmul.f32.gmra.mxu0 %v328
      %v856 = vpop.f32.mrf.mxu0
      %v857 = vadd.f32 0.0, %v856
      %858 = vdwg.mxu0
      %s859 = scalar_lea.vmem %s312, 48
      %860 = vst.msk [vmem:[%s859] sm:$0xff] %vm350, %v857
      %s861 = scalar_lea.vmem %s3, 192
      %v862 = vld [vmem:[%s861] sm:$0xff]
      %v863 = vld [vmem:[%s861 + $0x8] sm:$0xff]
      %v864 = vld [vmem:[%s861 + $0x10] sm:$0xff]
      %v865 = vld [vmem:[%s861 + $0x18] sm:$0xff]
      %866 = vmatpush.msra.mxu0 0.0
      %867 = vmatpush.msra.mxu0 0.0
      %868 = vmatpush.msra.mxu0 0.0
      %869 = vmatpush.msra.mxu0 0.0
      %870 = vmatpush.msra.mxu0 0.0
      %871 = vmatpush.msra.mxu0 0.0
      %872 = vmatpush.msra.mxu0 0.0
      %873 = vmatpush.msra.mxu0 0.0
      %874 = vmatpush.msra.mxu0 0.0
      %875 = vmatpush.msra.mxu0 0.0
      %876 = vmatpush.msra.mxu0 0.0
      %877 = vmatpush.msra.mxu0 0.0
      %878 = vmatpush.msra.mxu0 %v865
      %879 = vmatpush.msra.mxu0 %v864
      %880 = vmatpush.msra.mxu0 %v863
      %881 = vmatpush.msra.mxu0 %v862
      %882 = vmatmul.f32.gmra.mxu0 %v328
      %v883 = vpop.f32.mrf.mxu0
      %v884 = vadd.f32 0.0, %v883
      %885 = vdwg.mxu0
      %s886 = scalar_lea.vmem %s320, 48
      %887 = vst.msk [vmem:[%s886] sm:$0xff] %vm350, %v884
      %s888 = scalar_lea.vmem %s1, 224
      %v889 = vld [vmem:[%s888] sm:$0xff]
      %v890 = vld [vmem:[%s888 + $0x8] sm:$0xff]
      %v891 = vld [vmem:[%s888 + $0x10] sm:$0xff]
      %v892 = vld [vmem:[%s888 + $0x18] sm:$0xff]
      %893 = vmatpush.msra.mxu0 0.0
      %894 = vmatpush.msra.mxu0 0.0
      %895 = vmatpush.msra.mxu0 0.0
      %896 = vmatpush.msra.mxu0 0.0
      %897 = vmatpush.msra.mxu0 0.0
      %898 = vmatpush.msra.mxu0 0.0
      %899 = vmatpush.msra.mxu0 0.0
      %900 = vmatpush.msra.mxu0 0.0
      %901 = vmatpush.msra.mxu0 0.0
      %902 = vmatpush.msra.mxu0 0.0
      %903 = vmatpush.msra.mxu0 0.0
      %904 = vmatpush.msra.mxu0 0.0
      %905 = vmatpush.msra.mxu0 %v892
      %906 = vmatpush.msra.mxu0 %v891
      %907 = vmatpush.msra.mxu0 %v890
      %908 = vmatpush.msra.mxu0 %v889
      %909 = vmatmul.f32.gmra.mxu0 %v328
      %v910 = vpop.f32.mrf.mxu0
      %v911 = vadd.f32 0.0, %v910
      %912 = vdwg.mxu0
      %s913 = scalar_lea.vmem %s304, 56
      %914 = vst.msk [vmem:[%s913] sm:$0xff] %vm350, %v911
      %s915 = scalar_lea.vmem %s2, 224
      %v916 = vld [vmem:[%s915] sm:$0xff]
      %v917 = vld [vmem:[%s915 + $0x8] sm:$0xff]
      %v918 = vld [vmem:[%s915 + $0x10] sm:$0xff]
      %v919 = vld [vmem:[%s915 + $0x18] sm:$0xff]
      %920 = vmatpush.msra.mxu0 0.0
      %921 = vmatpush.msra.mxu0 0.0
      %922 = vmatpush.msra.mxu0 0.0
      %923 = vmatpush.msra.mxu0 0.0
      %924 = vmatpush.msra.mxu0 0.0
      %925 = vmatpush.msra.mxu0 0.0
      %926 = vmatpush.msra.mxu0 0.0
      %927 = vmatpush.msra.mxu0 0.0
      %928 = vmatpush.msra.mxu0 0.0
      %929 = vmatpush.msra.mxu0 0.0
      %930 = vmatpush.msra.mxu0 0.0
      %931 = vmatpush.msra.mxu0 0.0
      %932 = vmatpush.msra.mxu0 %v919
      %933 = vmatpush.msra.mxu0 %v918
      %934 = vmatpush.msra.mxu0 %v917
      %935 = vmatpush.msra.mxu0 %v916
      %936 = vmatmul.f32.gmra.mxu0 %v328
      %v937 = vpop.f32.mrf.mxu0
      %v938 = vadd.f32 0.0, %v937
      %939 = vdwg.mxu0
      %s940 = scalar_lea.vmem %s312, 56
      %941 = vst.msk [vmem:[%s940] sm:$0xff] %vm350, %v938
      %s942 = scalar_lea.vmem %s3, 224
      %v943 = vld [vmem:[%s942] sm:$0xff]
      %v944 = vld [vmem:[%s942 + $0x8] sm:$0xff]
      %v945 = vld [vmem:[%s942 + $0x10] sm:$0xff]
      %v946 = vld [vmem:[%s942 + $0x18] sm:$0xff]
      %947 = vmatpush.msra.mxu0 0.0
      %948 = vmatpush.msra.mxu0 0.0
      %949 = vmatpush.msra.mxu0 0.0
      %950 = vmatpush.msra.mxu0 0.0
      %951 = vmatpush.msra.mxu0 0.0
      %952 = vmatpush.msra.mxu0 0.0
      %953 = vmatpush.msra.mxu0 0.0
      %954 = vmatpush.msra.mxu0 0.0
      %955 = vmatpush.msra.mxu0 0.0
      %956 = vmatpush.msra.mxu0 0.0
      %957 = vmatpush.msra.mxu0 0.0
      %958 = vmatpush.msra.mxu0 0.0
      %959 = vmatpush.msra.mxu0 %v946
      %960 = vmatpush.msra.mxu0 %v945
      %961 = vmatpush.msra.mxu0 %v944
      %962 = vmatpush.msra.mxu0 %v943
      %963 = vmatmul.f32.gmra.mxu0 %v328
      %v964 = vpop.f32.mrf.mxu0
      %v965 = vadd.f32 0.0, %v964
      %966 = vdwg.mxu0
      %s967 = scalar_lea.vmem %s320, 56
      %968 = vst.msk [vmem:[%s967] sm:$0xff] %vm350, %v965
      %p969 = scmp.lt.s32.totalorder %s22, 1
      %s970 = scalar_select %p969, %s22, 1
      %p971 = scmp.lt.s32.totalorder %s23, 0
      %s972 = scalar_select %p971, %s23, 0
      %s973 = smul.addr %s970, 8
      %s974 = sadd.s32 %s972, %s973
      %s975 = smul.addr %s974, 8
      %s976 = scalar_lea.vmem %s4, %s975
      %p977 = scmp.lt.s32.totalorder %s22, 1
      %s978 = scalar_select %p977, %s22, 1
      %p979 = scmp.lt.s32.totalorder %s23, 0
      %s980 = scalar_select %p979, %s23, 0
      %s981 = smul.addr %s978, 8
      %s982 = sadd.s32 %s980, %s981
      %s983 = smul.addr %s982, 8
      %s984 = scalar_lea.vmem %s5, %s983
      %p985 = scmp.lt.s32.totalorder %s22, 1
      %s986 = scalar_select %p985, %s22, 1
      %p987 = scmp.lt.s32.totalorder %s23, 0
      %s988 = scalar_select %p987, %s23, 0
      %s989 = smul.addr %s986, 8
      %s990 = sadd.s32 %s988, %s989
      %s991 = smul.addr %s990, 8
      %s992 = scalar_lea.vmem %s6, %s991
      // Predicated region
      $region37: #{tpu_custom_call.1} parent=35 // pred_check
        %p993 = pneg %p141
      $region38: #{tpu_custom_call.1} parent=35 // pred_check_branch
        %995 = sbr.rel (%p993) target = $region40
      $region39: #{tpu_custom_call.1} parent=35 // pred_region
        _
      $region40: #{tpu_custom_call.1} parent=35 // pred_fallthru
        _
      // Predicated region
      $region41: #{tpu_custom_call.1} parent=35 // pred_check
        %p996 = pneg %p169
      $region42: #{tpu_custom_call.1} parent=35 // pred_check_branch
        %998 = sbr.rel (%p996) target = $region44
      $region43: #{tpu_custom_call.1} parent=35 // pred_region
        _
      $region44: #{tpu_custom_call.1} parent=35 // pred_fallthru
        _
      // Predicated region
      $region45: #{tpu_custom_call.1} parent=35 // pred_check
        %p999 = pneg %p197
      $region46: #{tpu_custom_call.1} parent=35 // pred_check_branch
        %1001 = sbr.rel (%p999) target = $region48
      $region47: #{tpu_custom_call.1} parent=35 // pred_region
        _
      $region48: #{tpu_custom_call.1} parent=35 // pred_fallthru
        _
    $region36: #{tpu_custom_call.1} parent=5 // pred_fallthru
      _
    %p1002 = scmp.le.s32.totalorder 2, %s13
    // Predicated region
    $region49: #{tpu_custom_call.1} parent=5 // pred_check
      %p1003 = pneg %p1002
    $region50: #{tpu_custom_call.1} parent=5 // pred_check_branch
      %1005 = sbr.rel (%p1003) target = $region52
    $region51: #{tpu_custom_call.1} parent=5 // pred_region
      %s1006 = ssub.s32 %s13, 2
      // Predicated region
      $region53: #{tpu_custom_call.1} parent=51 // pred_check
        %p1007 = pneg %p147
      $region54: #{tpu_custom_call.1} parent=51 // pred_check_branch
        %1009 = sbr.rel (%p1007) target = $region56
      $region55: #{tpu_custom_call.1} parent=51 // pred_region
        %p1010 = scmp.lt.s32.totalorder %s24, 1
        %s1011 = scalar_select %p1010, %s24, 1
        %p1012 = scmp.lt.s32.totalorder %s25, 0
        %s1013 = scalar_select %p1012, %s25, 0
        %s1014 = smul.addr %s1011, 8
        %s1015 = sadd.s32 %s1013, %s1014
        %s1016 = smul.addr %s1015, 8
        %s1017 = scalar_lea.vmem %s4, %s1016
      $region56: #{tpu_custom_call.1} parent=51 // pred_fallthru
        _
      // Predicated region
      $region57: #{tpu_custom_call.1} parent=51 // pred_check
        %p1018 = pneg %p175
      $region58: #{tpu_custom_call.1} parent=51 // pred_check_branch
        %1020 = sbr.rel (%p1018) target = $region60
      $region59: #{tpu_custom_call.1} parent=51 // pred_region
        %p1021 = scmp.lt.s32.totalorder %s24, 1
        %s1022 = scalar_select %p1021, %s24, 1
        %p1023 = scmp.lt.s32.totalorder %s25, 0
        %s1024 = scalar_select %p1023, %s25, 0
        %s1025 = smul.addr %s1022, 8
        %s1026 = sadd.s32 %s1024, %s1025
        %s1027 = smul.addr %s1026, 8
        %s1028 = scalar_lea.vmem %s5, %s1027
      $region60: #{tpu_custom_call.1} parent=51 // pred_fallthru
        _
      // Predicated region
      $region61: #{tpu_custom_call.1} parent=51 // pred_check
        %p1029 = pneg %p203
      $region62: #{tpu_custom_call.1} parent=51 // pred_check_branch
        %1031 = sbr.rel (%p1029) target = $region64
      $region63: #{tpu_custom_call.1} parent=51 // pred_region
        %p1032 = scmp.lt.s32.totalorder %s24, 1
        %s1033 = scalar_select %p1032, %s24, 1
        %p1034 = scmp.lt.s32.totalorder %s25, 0
        %s1035 = scalar_select %p1034, %s25, 0
        %s1036 = smul.addr %s1033, 8
        %s1037 = sadd.s32 %s1035, %s1036
        %s1038 = smul.addr %s1037, 8
        %s1039 = scalar_lea.vmem %s6, %s1038
      $region64: #{tpu_custom_call.1} parent=51 // pred_fallthru
        _
    $region52: #{tpu_custom_call.1} parent=5 // pred_fallthru
      _
  $region6: #{tpu_custom_call.1} parent=0 // loop_footer
    %s17 = sadd.s32 1, %s13
  $region7: #{tpu_custom_call.1} parent=0 // loop_footer_branch
    %12 = sbr.rel target = $region3
  $region8: #{tpu_custom_call.1} parent=0 // loop_exit
    _

</llo_original>
